<compile_context>
chip_gen: v7x
topology: tpu7x:2x2x1
jax: 0.10.0
libtpu: 0.0.40
codegen_flags: <defaults>
</compile_context>

<pallas_src>
import functools

import jax
import jax.numpy as jnp
from jax.experimental import pallas as pl
from jax.experimental.pallas import tpu as pltpu


# -----------------------------------------------------------------------------
# Fused Pallas kernel: both graph convs + GRU gating for one batch element.
# -----------------------------------------------------------------------------
def _tgcn_cell_kernel(lx_ref, lxeo_ref, hf_ref, lcols_ref, lquads_ref,
                      w1x_ref, w1h_ref, b1_ref, w2x_ref, w2h_ref, b2_ref,
                      out_ref):
    f32 = jnp.float32
    bf16 = jnp.bfloat16

    half = hf_ref.shape[1]              # N // 2
    hdim = w2h_ref.shape[0]             # H

    hf = hf_ref[0]                      # (N/2, 2H) f32 folded hidden
    h_e = hf[:, :hdim]                  # hidden at even nodes  (N/2, H)
    h_o = hf[:, hdim:]                  # hidden at odd  nodes  (N/2, H)
    lx = lx_ref[0]                      # (N, 1)  f32  precomputed L @ x
    lxeo = lxeo_ref[0]                  # (N/2, 2) f32 same, folded
    lcols = lcols_ref[...]              # (N, N)  bf16  L[:, perm]   (cols: even|odd)
    lquads = lquads_ref[...]            # (N, N)  bf16  L[perm][:, perm]

    # ---- graph conv 1 (gate pre-activations), natural node-row order --------
    lh = (jnp.dot(lcols[:, :half], h_e.astype(bf16), preferred_element_type=f32)
          + jnp.dot(lcols[:, half:], h_o.astype(bf16), preferred_element_type=f32))
    pre1 = (lx * w1x_ref[...]
            + jnp.dot(lh.astype(bf16), w1h_ref[...], preferred_element_type=f32)
            + b1_ref[...])              # (N, 2H)
    ru = jax.nn.sigmoid(pre1)

    # Flat torch.chunk of the (N*2H) gate vector, as pure slicing:
    #   r[m, j] = ru[m//2,        (m%2)*H + j]
    #   u[m, j] = ru[N/2 + m//2,  (m%2)*H + j]
    r_f = ru[:half]                     # (N/2, 2H): [:, :H] -> even m, [:, H:] -> odd m
    u_f = ru[half:]                     # (N/2, 2H)

    rh_e = (r_f[:, :hdim] * h_e).astype(bf16)   # (r*h) at even nodes
    rh_o = (r_f[:, hdim:] * h_o).astype(bf16)   # (r*h) at odd  nodes

    # ---- graph conv 2; output rows produced already split even/odd, so the
    #      chunk row-scramble never needs an in-kernel interleave/reshape -----
    lrh_e = (jnp.dot(lquads[:half, :half], rh_e, preferred_element_type=f32)
             + jnp.dot(lquads[:half, half:], rh_o, preferred_element_type=f32))
    lrh_o = (jnp.dot(lquads[half:, :half], rh_e, preferred_element_type=f32)
             + jnp.dot(lquads[half:, half:], rh_o, preferred_element_type=f32))
    w2x = w2x_ref[...]
    b2 = b2_ref[...]
    c_e = jnp.tanh(lxeo[:, 0:1] * w2x
                   + jnp.dot(lrh_e.astype(bf16), w2h_ref[...],
                             preferred_element_type=f32) + b2)
    c_o = jnp.tanh(lxeo[:, 1:2] * w2x
                   + jnp.dot(lrh_o.astype(bf16), w2h_ref[...],
                             preferred_element_type=f32) + b2)

    # ---- GRU gating; stored in the folded layout == new_h.reshape(N/2, 2H) --
    u_e = u_f[:, :hdim]
    u_o = u_f[:, hdim:]
    out_ref[0, :, :hdim] = u_e * h_e + (1.0 - u_e) * c_e
    out_ref[0, :, hdim:] = u_o * h_o + (1.0 - u_o) * c_o


# -----------------------------------------------------------------------------
# Parameter / buffer construction (deterministic, mirrors nn.Module __init__)
# -----------------------------------------------------------------------------
def calculate_laplacian_with_self_loop(adj):
    n = adj.shape[0]
    a = adj.astype(jnp.float32) + jnp.eye(n, dtype=jnp.float32)
    deg = jnp.sum(a, axis=1)
    d_inv_sqrt = jnp.diag(deg ** -0.5)
    return d_inv_sqrt @ a @ d_inv_sqrt


def _xavier_uniform(key, fan_in, fan_out):
    bound = (6.0 / (fan_in + fan_out)) ** 0.5
    return jax.random.uniform(key, (fan_in, fan_out), jnp.float32, -bound, bound)


def init_tgcn_cell_params(key, adj, hidden_dim):
    """No Python-int leaves in the returned pytree (jit-safe)."""
    k1, k2 = jax.random.split(key)
    H = hidden_dim
    N = adj.shape[0]
    lap = calculate_laplacian_with_self_loop(adj)
    # Even/odd node permutation; the two bf16 permuted Laplacian buffers
    # together cost exactly the bytes of one f32 Laplacian.
    perm = jnp.concatenate([jnp.arange(0, N, 2), jnp.arange(1, N, 2)])
    return {
        "laplacian": lap,                                      # f32 (reference / L@x)
        "lap_cols_bf16": lap[:, perm].astype(jnp.bfloat16),    # L[:, even|odd]
        "lap_quads_bf16": lap[perm][:, perm].astype(jnp.bfloat16),
        "w1": _xavier_uniform(k1, H + 1, 2 * H),
        "b1": jnp.full((2 * H,), 1.0, jnp.float32),            # bias_init = 1.0
        "w2": _xavier_uniform(k2, H + 1, H),
        "b2": jnp.zeros((H,), jnp.float32),                    # bias_init = 0.0
    }


# -----------------------------------------------------------------------------
# TGCNCell forward (Pallas-backed, fully fused)
# -----------------------------------------------------------------------------
def tgcn_cell_forward(params, x, hidden, *, single_buffer=True):
    B, N = x.shape
    H = params["w2"].shape[1]          # static (shape-derived) — jit-safe
    assert N % 2 == 0, "even node count assumed by the flat-chunk node pairing"
    half = N // 2
    lap = params["laplacian"]

    # L @ x per batch: one tiny XLA matmul outside the kernel (review item).
    lx = x @ lap.T                                  # (B, N) f32
    lx3 = lx.reshape(B, N, 1)
    lxeo = lx.reshape(B, half, 2)

    hf = hidden.reshape(B, half, 2 * H)             # folded hidden (free reshape)

    w1, b1 = params["w1"], params["b1"]
    w2, b2 = params["w2"], params["b2"]
    w1x = w1[0:1, :]                                # (1, 2H) f32 (VPU operand)
    w1h = w1[1:, :].astype(jnp.bfloat16)            # (H, 2H) bf16 (MXU operand)
    w2x = w2[0:1, :]                                # (1, H)  f32
    w2h = w2[1:, :].astype(jnp.bfloat16)            # (H, H)  bf16
    b1r = b1.reshape(1, 2 * H)
    b2r = b2.reshape(1, H)
    lcols = params["lap_cols_bf16"]
    lquads = params["lap_quads_bf16"]

    # Grid-invariant blocks: single-buffered when supported.
    inv_kwargs = {}
    if single_buffer and hasattr(pl, "Buffered"):
        inv_kwargs["pipeline_mode"] = pl.Buffered(1)

    def inv_spec(shape):
        zero_map = lambda i, _r=len(shape): (0,) * _r
        try:
            return pl.BlockSpec(shape, zero_map, **inv_kwargs)
        except TypeError:
            return pl.BlockSpec(shape, zero_map)

    in_specs = [
        pl.BlockSpec((1, N, 1), lambda i: (i, 0, 0)),          # L @ x (node order)
        pl.BlockSpec((1, half, 2), lambda i: (i, 0, 0)),       # L @ x (folded)
        pl.BlockSpec((1, half, 2 * H), lambda i: (i, 0, 0)),   # folded hidden
        inv_spec((N, N)),                                      # L[:, perm]        bf16
        inv_spec((N, N)),                                      # L[perm][:, perm]  bf16
        inv_spec((1, 2 * H)),                                  # w1 x-row
        inv_spec((H, 2 * H)),                                  # w1 h-rows  bf16
        inv_spec((1, 2 * H)),                                  # b1
        inv_spec((1, H)),                                      # w2 x-row
        inv_spec((H, H)),                                      # w2 h-rows  bf16
        inv_spec((1, H)),                                      # b2
    ]
    out_spec = pl.BlockSpec((1, half, 2 * H), lambda i: (i, 0, 0))

    # Explicit VMEM limit sized from the actual blocks (with headroom).
    per_step_bytes = 4 * (N + 2 * half + 2 * (half * 2 * H))          # per-batch in+out
    inv_bytes = (2 * N * N * 2                                        # bf16 Laplacians
                 + 2 * H * (2 * H + H)                                # bf16 weights
                 + 4 * (2 * 2 * H + 2 * H + 2 * H))                   # f32 x-rows/biases
    bufs = 1 if single_buffer else 2
    vmem_limit = int(min(128 * 2 ** 20,
                         max(32 * 2 ** 20, 2 * (2 * per_step_bytes + bufs * inv_bytes))))

    cp_cls = getattr(pltpu, "CompilerParams", None) or getattr(pltpu, "TPUCompilerParams")
    compiler_params = cp_cls(dimension_semantics=("parallel",),
                             vmem_limit_bytes=vmem_limit)

    out = pl.pallas_call(
        _tgcn_cell_kernel,
        out_shape=jax.ShapeDtypeStruct((B, half, 2 * H), jnp.float32),
        grid=(B,),
        in_specs=in_specs,
        out_specs=out_spec,
        compiler_params=compiler_params,
    )(lx3, lxeo, hf, lcols, lquads, w1x, w1h, b1r, w2x, w2h, b2r)

    new_h = out.reshape(B, N * H)      # folded layout == flat new_hidden, bit-for-bit
    return new_h, new_h


# -----------------------------------------------------------------------------
# Pure-JAX reference that literally follows the PyTorch reshapes/transposes
# -----------------------------------------------------------------------------
def _graph_conv_ref(x, hidden, lap, w, b, H):
    B, N = x.shape
    O = w.shape[1]
    cat = jnp.concatenate([x.reshape(B, N, 1), hidden.reshape(B, N, H)], axis=2)
    cat = jnp.transpose(cat, (1, 2, 0)).reshape(N, (H + 1) * B)
    a = jnp.dot(lap, cat)
    a = a.reshape(N, H + 1, B)
    a = jnp.transpose(a, (2, 0, 1)).reshape(B * N, H + 1)
    out = jnp.dot(a, w) + b
    return out.reshape(B, N * O)


def tgcn_cell_ref(params, x, hidden):
    H = params["w2"].shape[1]
    conc = jax.nn.sigmoid(
        _graph_conv_ref(x, hidden, params["laplacian"], params["w1"], params["b1"], H))
    r, u = jnp.split(conc, 2, axis=1)      # flat chunk, same quirk as torch
    c = jnp.tanh(
        _graph_conv_ref(x, r * hidden, params["laplacian"], params["w2"], params["b2"], H))
    new_h = u * hidden + (1.0 - u) * c
    return new_h, new_h


# -----------------------------------------------------------------------------
if __name__ == "__main__":
    B, N, H = 2, 16, 32

    key = jax.random.PRNGKey(0)
    k_adj, k_x, k_h, k_params = jax.random.split(key, 4)

    adj_raw = jax.random.uniform(k_adj, (N, N), jnp.float32)
    adj = 0.5 * (adj_raw + adj_raw.T)                    # symmetric adjacency
    params = init_tgcn_cell_params(k_params, adj, H)

    x = jax.random.normal(k_x, (B, N), jnp.float32)
    hidden = jax.random.normal(k_h, (B, N * H), jnp.float32)

    def run(single_buffer):
        fwd = functools.partial(tgcn_cell_forward, single_buffer=single_buffer)
        o, _ = jax.jit(fwd)(params, x, hidden)
        return jax.block_until_ready(o)

    try:
        out = run(True)
    except Exception:
        # Fallback: identical kernel with default (double) buffering of the
        # grid-invariant blocks, in case pl.Buffered(1) is unavailable here.
        out = run(False)

    ref_out, _ = tgcn_cell_ref(params, x, hidden)
    assert out.shape == (B, N * H)
    max_err = float(jnp.max(jnp.abs(out - ref_out)))
    # bf16 Laplacian / weight operands (f32 accumulation) -> loose-ish tolerance.
    assert bool(jnp.allclose(out, ref_out, rtol=2e-2, atol=2e-2)), \
        f"mismatch vs reference (max abs err {max_err:.3e})"

    print("KERNEL_OK")
</pallas_src>

<mosaic_0001>
module attributes {stable_mosaic.version = 11 : i64} {
  func.func @_tgcn_cell_kernel(%arg0: i32, %arg1: memref<1x16x1xf32, #tpu.memory_space<vmem>>, %arg2: memref<1x8x2xf32, #tpu.memory_space<vmem>>, %arg3: memref<1x8x64xf32, #tpu.memory_space<vmem>>, %arg4: memref<16x16xbf16, #tpu.memory_space<vmem>>, %arg5: memref<16x16xbf16, #tpu.memory_space<vmem>>, %arg6: memref<1x64xf32, #tpu.memory_space<vmem>>, %arg7: memref<32x64xbf16, #tpu.memory_space<vmem>>, %arg8: memref<1x64xf32, #tpu.memory_space<vmem>>, %arg9: memref<1x32xf32, #tpu.memory_space<vmem>>, %arg10: memref<32x32xbf16, #tpu.memory_space<vmem>>, %arg11: memref<1x32xf32, #tpu.memory_space<vmem>>, %arg12: memref<1x8x64xf32, #tpu.memory_space<vmem>>) attributes {dimension_semantics = [#tpu.dimension_semantics<parallel>], iteration_bounds = array<i64: 2>, scalar_prefetch = 0 : i64, scratch_operands = 0 : i64, tpu.core_type = #tpu.core_type<tc>, window_params = [{transform_indices = @transform_0, window_bounds = array<i64: 1, 16, 1>}, {transform_indices = @transform_1, window_bounds = array<i64: 1, 8, 2>}, {transform_indices = @transform_2, window_bounds = array<i64: 1, 8, 64>}, {pipeline_mode = #tpu.pipeline_mode<synchronous>, transform_indices = @transform_3, window_bounds = array<i64: 16, 16>}, {pipeline_mode = #tpu.pipeline_mode<synchronous>, transform_indices = @transform_4, window_bounds = array<i64: 16, 16>}, {pipeline_mode = #tpu.pipeline_mode<synchronous>, transform_indices = @transform_5, window_bounds = array<i64: 1, 64>}, {pipeline_mode = #tpu.pipeline_mode<synchronous>, transform_indices = @transform_6, window_bounds = array<i64: 32, 64>}, {pipeline_mode = #tpu.pipeline_mode<synchronous>, transform_indices = @transform_7, window_bounds = array<i64: 1, 64>}, {pipeline_mode = #tpu.pipeline_mode<synchronous>, transform_indices = @transform_8, window_bounds = array<i64: 1, 32>}, {pipeline_mode = #tpu.pipeline_mode<synchronous>, transform_indices = @transform_9, window_bounds = array<i64: 32, 32>}, {pipeline_mode = #tpu.pipeline_mode<synchronous>, transform_indices = @transform_10, window_bounds = array<i64: 1, 32>}, {transform_indices = @transform_11, window_bounds = array<i64: 1, 8, 64>}]} {
    %c0 = arith.constant 0 : index
    %c0_0 = arith.constant 0 : index
    %c0_1 = arith.constant 0 : index
    %0 = vector.load %arg3[%c0, %c0_0, %c0_1] : memref<1x8x64xf32, #tpu.memory_space<vmem>>, vector<1x8x64xf32>
    %1 = vector.shape_cast %0 : vector<1x8x64xf32> to vector<8x64xf32>
    %2 = vector.extract_strided_slice %1 {offsets = [0, 0], sizes = [8, 32], strides = [1, 1]} : vector<8x64xf32> to vector<8x32xf32>
    %3 = vector.extract_strided_slice %1 {offsets = [0, 32], sizes = [8, 32], strides = [1, 1]} : vector<8x64xf32> to vector<8x32xf32>
    %c0_2 = arith.constant 0 : index
    %c0_3 = arith.constant 0 : index
    %c0_4 = arith.constant 0 : index
    %4 = vector.load %arg1[%c0_2, %c0_3, %c0_4] : memref<1x16x1xf32, #tpu.memory_space<vmem>>, vector<1x16x1xf32>
    %5 = vector.shape_cast %4 : vector<1x16x1xf32> to vector<16x1xf32>
    %c0_5 = arith.constant 0 : index
    %c0_6 = arith.constant 0 : index
    %c0_7 = arith.constant 0 : index
    %6 = vector.load %arg2[%c0_5, %c0_6, %c0_7] : memref<1x8x2xf32, #tpu.memory_space<vmem>>, vector<1x8x2xf32>
    %7 = vector.shape_cast %6 : vector<1x8x2xf32> to vector<8x2xf32>
    %c0_8 = arith.constant 0 : index
    %c0_9 = arith.constant 0 : index
    %8 = vector.load %arg4[%c0_8, %c0_9] : memref<16x16xbf16, #tpu.memory_space<vmem>>, vector<16x16xbf16>
    %c0_10 = arith.constant 0 : index
    %c0_11 = arith.constant 0 : index
    %9 = vector.load %arg5[%c0_10, %c0_11] : memref<16x16xbf16, #tpu.memory_space<vmem>>, vector<16x16xbf16>
    %10 = vector.extract_strided_slice %8 {offsets = [0, 0], sizes = [16, 8], strides = [1, 1]} : vector<16x16xbf16> to vector<16x8xbf16>
    %11 = arith.truncf %2 : vector<8x32xf32> to vector<8x32xbf16>
    %cst = arith.constant dense<0.000000e+00> : vector<16x32xf32>
    %12 = tpu.matmul %10, %11, %cst {dimension_numbers = #tpu.dot_dimension_numbers<[1], [0], [0], [1], [0, 0, 1, 1], [], []>} : vector<16x8xbf16>, vector<8x32xbf16>, vector<16x32xf32> -> vector<16x32xf32>
    %13 = vector.extract_strided_slice %8 {offsets = [0, 8], sizes = [16, 8], strides = [1, 1]} : vector<16x16xbf16> to vector<16x8xbf16>
    %14 = arith.truncf %3 : vector<8x32xf32> to vector<8x32xbf16>
    %cst_12 = arith.constant dense<0.000000e+00> : vector<16x32xf32>
    %15 = tpu.matmul %13, %14, %cst_12 {dimension_numbers = #tpu.dot_dimension_numbers<[1], [0], [0], [1], [0, 0, 1, 1], [], []>} : vector<16x8xbf16>, vector<8x32xbf16>, vector<16x32xf32> -> vector<16x32xf32>
    %16 = arith.addf %12, %15 : vector<16x32xf32>
    %c0_13 = arith.constant 0 : index
    %c0_14 = arith.constant 0 : index
    %17 = vector.load %arg6[%c0_13, %c0_14] : memref<1x64xf32, #tpu.memory_space<vmem>>, vector<1x64xf32>
    %18 = vector.broadcast %5 : vector<16x1xf32> to vector<16x64xf32>
    %19 = vector.broadcast %17 : vector<1x64xf32> to vector<16x64xf32>
    %20 = arith.mulf %18, %19 : vector<16x64xf32>
    %21 = arith.truncf %16 : vector<16x32xf32> to vector<16x32xbf16>
    %c0_15 = arith.constant 0 : index
    %c0_16 = arith.constant 0 : index
    %22 = vector.load %arg7[%c0_15, %c0_16] : memref<32x64xbf16, #tpu.memory_space<vmem>>, vector<32x64xbf16>
    %cst_17 = arith.constant dense<0.000000e+00> : vector<16x64xf32>
    %23 = tpu.matmul %21, %22, %cst_17 {dimension_numbers = #tpu.dot_dimension_numbers<[1], [0], [0], [1], [0, 0, 1, 1], [], []>} : vector<16x32xbf16>, vector<32x64xbf16>, vector<16x64xf32> -> vector<16x64xf32>
    %24 = arith.addf %20, %23 : vector<16x64xf32>
    %c0_18 = arith.constant 0 : index
    %c0_19 = arith.constant 0 : index
    %25 = vector.load %arg8[%c0_18, %c0_19] : memref<1x64xf32, #tpu.memory_space<vmem>>, vector<1x64xf32>
    %26 = vector.broadcast %25 : vector<1x64xf32> to vector<16x64xf32>
    %27 = arith.addf %24, %26 : vector<16x64xf32>
    %28 = arith.negf %27 : vector<16x64xf32>
    %29 = math.exp %28 : vector<16x64xf32>
    %cst_20 = arith.constant 1.000000e+00 : f32
    %30 = vector.broadcast %cst_20 : f32 to vector<16x64xf32>
    %31 = arith.addf %30, %29 : vector<16x64xf32>
    %32 = arith.divf %30, %31 : vector<16x64xf32>
    %33 = vector.extract_strided_slice %32 {offsets = [0, 0], sizes = [8, 64], strides = [1, 1]} : vector<16x64xf32> to vector<8x64xf32>
    %34 = vector.extract_strided_slice %32 {offsets = [8, 0], sizes = [8, 64], strides = [1, 1]} : vector<16x64xf32> to vector<8x64xf32>
    %35 = vector.extract_strided_slice %33 {offsets = [0, 0], sizes = [8, 32], strides = [1, 1]} : vector<8x64xf32> to vector<8x32xf32>
    %36 = arith.mulf %35, %2 : vector<8x32xf32>
    %37 = arith.truncf %36 : vector<8x32xf32> to vector<8x32xbf16>
    %38 = vector.extract_strided_slice %33 {offsets = [0, 32], sizes = [8, 32], strides = [1, 1]} : vector<8x64xf32> to vector<8x32xf32>
    %39 = arith.mulf %38, %3 : vector<8x32xf32>
    %40 = arith.truncf %39 : vector<8x32xf32> to vector<8x32xbf16>
    %41 = vector.extract_strided_slice %9 {offsets = [0, 0], sizes = [8, 8], strides = [1, 1]} : vector<16x16xbf16> to vector<8x8xbf16>
    %cst_21 = arith.constant dense<0.000000e+00> : vector<8x32xf32>
    %42 = tpu.matmul %41, %37, %cst_21 {dimension_numbers = #tpu.dot_dimension_numbers<[1], [0], [0], [1], [0, 0, 1, 1], [], []>} : vector<8x8xbf16>, vector<8x32xbf16>, vector<8x32xf32> -> vector<8x32xf32>
    %43 = vector.extract_strided_slice %9 {offsets = [0, 8], sizes = [8, 8], strides = [1, 1]} : vector<16x16xbf16> to vector<8x8xbf16>
    %cst_22 = arith.constant dense<0.000000e+00> : vector<8x32xf32>
    %44 = tpu.matmul %43, %40, %cst_22 {dimension_numbers = #tpu.dot_dimension_numbers<[1], [0], [0], [1], [0, 0, 1, 1], [], []>} : vector<8x8xbf16>, vector<8x32xbf16>, vector<8x32xf32> -> vector<8x32xf32>
    %45 = arith.addf %42, %44 : vector<8x32xf32>
    %46 = vector.extract_strided_slice %9 {offsets = [8, 0], sizes = [8, 8], strides = [1, 1]} : vector<16x16xbf16> to vector<8x8xbf16>
    %cst_23 = arith.constant dense<0.000000e+00> : vector<8x32xf32>
    %47 = tpu.matmul %46, %37, %cst_23 {dimension_numbers = #tpu.dot_dimension_numbers<[1], [0], [0], [1], [0, 0, 1, 1], [], []>} : vector<8x8xbf16>, vector<8x32xbf16>, vector<8x32xf32> -> vector<8x32xf32>
    %48 = vector.extract_strided_slice %9 {offsets = [8, 8], sizes = [8, 8], strides = [1, 1]} : vector<16x16xbf16> to vector<8x8xbf16>
    %cst_24 = arith.constant dense<0.000000e+00> : vector<8x32xf32>
    %49 = tpu.matmul %48, %40, %cst_24 {dimension_numbers = #tpu.dot_dimension_numbers<[1], [0], [0], [1], [0, 0, 1, 1], [], []>} : vector<8x8xbf16>, vector<8x32xbf16>, vector<8x32xf32> -> vector<8x32xf32>
    %50 = arith.addf %47, %49 : vector<8x32xf32>
    %c0_25 = arith.constant 0 : index
    %c0_26 = arith.constant 0 : index
    %51 = vector.load %arg9[%c0_25, %c0_26] : memref<1x32xf32, #tpu.memory_space<vmem>>, vector<1x32xf32>
    %c0_27 = arith.constant 0 : index
    %c0_28 = arith.constant 0 : index
    %52 = vector.load %arg11[%c0_27, %c0_28] : memref<1x32xf32, #tpu.memory_space<vmem>>, vector<1x32xf32>
    %53 = vector.extract_strided_slice %7 {offsets = [0, 0], sizes = [8, 1], strides = [1, 1]} : vector<8x2xf32> to vector<8x1xf32>
    %54 = vector.broadcast %53 : vector<8x1xf32> to vector<8x32xf32>
    %55 = vector.broadcast %51 : vector<1x32xf32> to vector<8x32xf32>
    %56 = arith.mulf %54, %55 : vector<8x32xf32>
    %57 = arith.truncf %45 : vector<8x32xf32> to vector<8x32xbf16>
    %c0_29 = arith.constant 0 : index
    %c0_30 = arith.constant 0 : index
    %58 = vector.load %arg10[%c0_29, %c0_30] : memref<32x32xbf16, #tpu.memory_space<vmem>>, vector<32x32xbf16>
    %cst_31 = arith.constant dense<0.000000e+00> : vector<8x32xf32>
    %59 = tpu.matmul %57, %58, %cst_31 {dimension_numbers = #tpu.dot_dimension_numbers<[1], [0], [0], [1], [0, 0, 1, 1], [], []>} : vector<8x32xbf16>, vector<32x32xbf16>, vector<8x32xf32> -> vector<8x32xf32>
    %60 = arith.addf %56, %59 : vector<8x32xf32>
    %61 = vector.broadcast %52 : vector<1x32xf32> to vector<8x32xf32>
    %62 = arith.addf %60, %61 : vector<8x32xf32>
    %63 = math.tanh %62 : vector<8x32xf32>
    %64 = vector.extract_strided_slice %7 {offsets = [0, 1], sizes = [8, 1], strides = [1, 1]} : vector<8x2xf32> to vector<8x1xf32>
    %65 = vector.broadcast %64 : vector<8x1xf32> to vector<8x32xf32>
    %66 = vector.broadcast %51 : vector<1x32xf32> to vector<8x32xf32>
    %67 = arith.mulf %65, %66 : vector<8x32xf32>
    %68 = arith.truncf %50 : vector<8x32xf32> to vector<8x32xbf16>
    %c0_32 = arith.constant 0 : index
    %c0_33 = arith.constant 0 : index
    %69 = vector.load %arg10[%c0_32, %c0_33] : memref<32x32xbf16, #tpu.memory_space<vmem>>, vector<32x32xbf16>
    %cst_34 = arith.constant dense<0.000000e+00> : vector<8x32xf32>
    %70 = tpu.matmul %68, %69, %cst_34 {dimension_numbers = #tpu.dot_dimension_numbers<[1], [0], [0], [1], [0, 0, 1, 1], [], []>} : vector<8x32xbf16>, vector<32x32xbf16>, vector<8x32xf32> -> vector<8x32xf32>
    %71 = arith.addf %67, %70 : vector<8x32xf32>
    %72 = vector.broadcast %52 : vector<1x32xf32> to vector<8x32xf32>
    %73 = arith.addf %71, %72 : vector<8x32xf32>
    %74 = math.tanh %73 : vector<8x32xf32>
    %75 = vector.extract_strided_slice %34 {offsets = [0, 0], sizes = [8, 32], strides = [1, 1]} : vector<8x64xf32> to vector<8x32xf32>
    %76 = vector.extract_strided_slice %34 {offsets = [0, 32], sizes = [8, 32], strides = [1, 1]} : vector<8x64xf32> to vector<8x32xf32>
    %77 = arith.mulf %75, %2 : vector<8x32xf32>
    %cst_35 = arith.constant 1.000000e+00 : f32
    %78 = vector.broadcast %cst_35 : f32 to vector<8x32xf32>
    %79 = arith.subf %78, %75 : vector<8x32xf32>
    %80 = arith.mulf %79, %63 : vector<8x32xf32>
    %81 = arith.addf %77, %80 : vector<8x32xf32>
    %c0_36 = arith.constant 0 : index
    %c0_37 = arith.constant 0 : index
    %c0_38 = arith.constant 0 : index
    %82 = vector.load %arg12[%c0_36, %c0_37, %c0_38] : memref<1x8x64xf32, #tpu.memory_space<vmem>>, vector<1x8x32xf32>
    %83 = vector.shape_cast %82 : vector<1x8x32xf32> to vector<8x32xf32>
    %84 = vector.shape_cast %81 : vector<8x32xf32> to vector<1x8x32xf32>
    tpu.vector_store %arg12[%c0_36, %c0_37, %c0_38], %84 {strides = array<i32>} : memref<1x8x64xf32, #tpu.memory_space<vmem>>, vector<1x8x32xf32>,
    %85 = arith.mulf %76, %3 : vector<8x32xf32>
    %cst_39 = arith.constant 1.000000e+00 : f32
    %86 = vector.broadcast %cst_39 : f32 to vector<8x32xf32>
    %87 = arith.subf %86, %76 : vector<8x32xf32>
    %88 = arith.mulf %87, %74 : vector<8x32xf32>
    %89 = arith.addf %85, %88 : vector<8x32xf32>
    %c0_40 = arith.constant 0 : index
    %c0_41 = arith.constant 0 : index
    %c32 = arith.constant 32 : index
    %90 = vector.load %arg12[%c0_40, %c0_41, %c32] : memref<1x8x64xf32, #tpu.memory_space<vmem>>, vector<1x8x32xf32>
    %91 = vector.shape_cast %90 : vector<1x8x32xf32> to vector<8x32xf32>
    %92 = vector.shape_cast %89 : vector<8x32xf32> to vector<1x8x32xf32>
    tpu.vector_store %arg12[%c0_40, %c0_41, %c32], %92 {strides = array<i32>} : memref<1x8x64xf32, #tpu.memory_space<vmem>>, vector<1x8x32xf32>,
    return
  }
  func.func @transform_0(%arg0: i32) -> (i32, i32, i32) {
    %c0_i32 = arith.constant 0 : i32
    %c0_i32_0 = arith.constant 0 : i32
    %c0_i32_1 = arith.constant 0 : i32
    return %arg0, %c0_i32, %c0_i32_0 : i32, i32, i32
  }
  func.func @transform_1(%arg0: i32) -> (i32, i32, i32) {
    %c0_i32 = arith.constant 0 : i32
    %c0_i32_0 = arith.constant 0 : i32
    %c0_i32_1 = arith.constant 0 : i32
    return %arg0, %c0_i32, %c0_i32_0 : i32, i32, i32
  }
  func.func @transform_2(%arg0: i32) -> (i32, i32, i32) {
    %c0_i32 = arith.constant 0 : i32
    %c0_i32_0 = arith.constant 0 : i32
    %c0_i32_1 = arith.constant 0 : i32
    return %arg0, %c0_i32, %c0_i32_0 : i32, i32, i32
  }
  func.func @transform_3(%arg0: i32) -> (i32, i32) {
    %c0_i32 = arith.constant 0 : i32
    %c0_i32_0 = arith.constant 0 : i32
    %c0_i32_1 = arith.constant 0 : i32
    return %c0_i32, %c0_i32_0 : i32, i32
  }
  func.func @transform_4(%arg0: i32) -> (i32, i32) {
    %c0_i32 = arith.constant 0 : i32
    %c0_i32_0 = arith.constant 0 : i32
    %c0_i32_1 = arith.constant 0 : i32
    return %c0_i32, %c0_i32_0 : i32, i32
  }
  func.func @transform_5(%arg0: i32) -> (i32, i32) {
    %c0_i32 = arith.constant 0 : i32
    %c0_i32_0 = arith.constant 0 : i32
    %c0_i32_1 = arith.constant 0 : i32
    return %c0_i32, %c0_i32_0 : i32, i32
  }
  func.func @transform_6(%arg0: i32) -> (i32, i32) {
    %c0_i32 = arith.constant 0 : i32
    %c0_i32_0 = arith.constant 0 : i32
    %c0_i32_1 = arith.constant 0 : i32
    return %c0_i32, %c0_i32_0 : i32, i32
  }
  func.func @transform_7(%arg0: i32) -> (i32, i32) {
    %c0_i32 = arith.constant 0 : i32
    %c0_i32_0 = arith.constant 0 : i32
    %c0_i32_1 = arith.constant 0 : i32
    return %c0_i32, %c0_i32_0 : i32, i32
  }
  func.func @transform_8(%arg0: i32) -> (i32, i32) {
    %c0_i32 = arith.constant 0 : i32
    %c0_i32_0 = arith.constant 0 : i32
    %c0_i32_1 = arith.constant 0 : i32
    return %c0_i32, %c0_i32_0 : i32, i32
  }
  func.func @transform_9(%arg0: i32) -> (i32, i32) {
    %c0_i32 = arith.constant 0 : i32
    %c0_i32_0 = arith.constant 0 : i32
    %c0_i32_1 = arith.constant 0 : i32
    return %c0_i32, %c0_i32_0 : i32, i32
  }
  func.func @transform_10(%arg0: i32) -> (i32, i32) {
    %c0_i32 = arith.constant 0 : i32
    %c0_i32_0 = arith.constant 0 : i32
    %c0_i32_1 = arith.constant 0 : i32
    return %c0_i32, %c0_i32_0 : i32, i32
  }
  func.func @transform_11(%arg0: i32) -> (i32, i32, i32) {
    %c0_i32 = arith.constant 0 : i32
    %c0_i32_0 = arith.constant 0 : i32
    %c0_i32_1 = arith.constant 0 : i32
    return %arg0, %c0_i32, %c0_i32_0 : i32, i32, i32
  }
}

module attributes {stable_mosaic.version = 11 : i64} {
  func.func @_tgcn_cell_kernel(%arg0: i32, %arg1: memref<1x16x1xf32, #tpu.memory_space<vmem>>, %arg2: memref<1x8x2xf32, #tpu.memory_space<vmem>>, %arg3: memref<1x8x64xf32, #tpu.memory_space<vmem>>, %arg4: memref<16x16xbf16, #tpu.memory_space<vmem>>, %arg5: memref<16x16xbf16, #tpu.memory_space<vmem>>, %arg6: memref<1x64xf32, #tpu.memory_space<vmem>>, %arg7: memref<32x64xbf16, #tpu.memory_space<vmem>>, %arg8: memref<1x64xf32, #tpu.memory_space<vmem>>, %arg9: memref<1x32xf32, #tpu.memory_space<vmem>>, %arg10: memref<32x32xbf16, #tpu.memory_space<vmem>>, %arg11: memref<1x32xf32, #tpu.memory_space<vmem>>, %arg12: memref<1x8x64xf32, #tpu.memory_space<vmem>>) attributes {dimension_semantics = [#tpu.dimension_semantics<parallel>], iteration_bounds = array<i64: 2>, scalar_prefetch = 0 : i64, scratch_operands = 0 : i64, tpu.core_type = #tpu.core_type<tc>, window_params = [{transform_indices = @transform_0, window_bounds = array<i64: 1, 16, 1>}, {transform_indices = @transform_1, window_bounds = array<i64: 1, 8, 2>}, {transform_indices = @transform_2, window_bounds = array<i64: 1, 8, 64>}, {pipeline_mode = #tpu.pipeline_mode<synchronous>, transform_indices = @transform_3, window_bounds = array<i64: 16, 16>}, {pipeline_mode = #tpu.pipeline_mode<synchronous>, transform_indices = @transform_4, window_bounds = array<i64: 16, 16>}, {pipeline_mode = #tpu.pipeline_mode<synchronous>, transform_indices = @transform_5, window_bounds = array<i64: 1, 64>}, {pipeline_mode = #tpu.pipeline_mode<synchronous>, transform_indices = @transform_6, window_bounds = array<i64: 32, 64>}, {pipeline_mode = #tpu.pipeline_mode<synchronous>, transform_indices = @transform_7, window_bounds = array<i64: 1, 64>}, {pipeline_mode = #tpu.pipeline_mode<synchronous>, transform_indices = @transform_8, window_bounds = array<i64: 1, 32>}, {pipeline_mode = #tpu.pipeline_mode<synchronous>, transform_indices = @transform_9, window_bounds = array<i64: 32, 32>}, {pipeline_mode = #tpu.pipeline_mode<synchronous>, transform_indices = @transform_10, window_bounds = array<i64: 1, 32>}, {transform_indices = @transform_11, window_bounds = array<i64: 1, 8, 64>}]} {
    %c0 = arith.constant 0 : index
    %c0_0 = arith.constant 0 : index
    %c0_1 = arith.constant 0 : index
    %0 = vector.load %arg3[%c0, %c0_0, %c0_1] : memref<1x8x64xf32, #tpu.memory_space<vmem>>, vector<1x8x64xf32>
    %1 = vector.shape_cast %0 : vector<1x8x64xf32> to vector<8x64xf32>
    %2 = vector.extract_strided_slice %1 {offsets = [0, 0], sizes = [8, 32], strides = [1, 1]} : vector<8x64xf32> to vector<8x32xf32>
    %3 = vector.extract_strided_slice %1 {offsets = [0, 32], sizes = [8, 32], strides = [1, 1]} : vector<8x64xf32> to vector<8x32xf32>
    %c0_2 = arith.constant 0 : index
    %c0_3 = arith.constant 0 : index
    %c0_4 = arith.constant 0 : index
    %4 = vector.load %arg1[%c0_2, %c0_3, %c0_4] : memref<1x16x1xf32, #tpu.memory_space<vmem>>, vector<1x16x1xf32>
    %5 = vector.shape_cast %4 : vector<1x16x1xf32> to vector<16x1xf32>
    %c0_5 = arith.constant 0 : index
    %c0_6 = arith.constant 0 : index
    %c0_7 = arith.constant 0 : index
    %6 = vector.load %arg2[%c0_5, %c0_6, %c0_7] : memref<1x8x2xf32, #tpu.memory_space<vmem>>, vector<1x8x2xf32>
    %7 = vector.shape_cast %6 : vector<1x8x2xf32> to vector<8x2xf32>
    %c0_8 = arith.constant 0 : index
    %c0_9 = arith.constant 0 : index
    %8 = vector.load %arg4[%c0_8, %c0_9] : memref<16x16xbf16, #tpu.memory_space<vmem>>, vector<16x16xbf16>
    %c0_10 = arith.constant 0 : index
    %c0_11 = arith.constant 0 : index
    %9 = vector.load %arg5[%c0_10, %c0_11] : memref<16x16xbf16, #tpu.memory_space<vmem>>, vector<16x16xbf16>
    %10 = vector.extract_strided_slice %8 {offsets = [0, 0], sizes = [16, 8], strides = [1, 1]} : vector<16x16xbf16> to vector<16x8xbf16>
    %11 = arith.truncf %2 : vector<8x32xf32> to vector<8x32xbf16>
    %cst = arith.constant dense<0.000000e+00> : vector<16x32xf32>
    %12 = tpu.matmul %10, %11, %cst {dimension_numbers = #tpu.dot_dimension_numbers<[1], [0], [0], [1], [0, 0, 1, 1], [], []>} : vector<16x8xbf16>, vector<8x32xbf16>, vector<16x32xf32> -> vector<16x32xf32>
    %13 = vector.extract_strided_slice %8 {offsets = [0, 8], sizes = [16, 8], strides = [1, 1]} : vector<16x16xbf16> to vector<16x8xbf16>
    %14 = arith.truncf %3 : vector<8x32xf32> to vector<8x32xbf16>
    %cst_12 = arith.constant dense<0.000000e+00> : vector<16x32xf32>
    %15 = tpu.matmul %13, %14, %cst_12 {dimension_numbers = #tpu.dot_dimension_numbers<[1], [0], [0], [1], [0, 0, 1, 1], [], []>} : vector<16x8xbf16>, vector<8x32xbf16>, vector<16x32xf32> -> vector<16x32xf32>
    %16 = arith.addf %12, %15 : vector<16x32xf32>
    %c0_13 = arith.constant 0 : index
    %c0_14 = arith.constant 0 : index
    %17 = vector.load %arg6[%c0_13, %c0_14] : memref<1x64xf32, #tpu.memory_space<vmem>>, vector<1x64xf32>
    %18 = vector.broadcast %5 : vector<16x1xf32> to vector<16x64xf32>
    %19 = vector.broadcast %17 : vector<1x64xf32> to vector<16x64xf32>
    %20 = arith.mulf %18, %19 : vector<16x64xf32>
    %21 = arith.truncf %16 : vector<16x32xf32> to vector<16x32xbf16>
    %c0_15 = arith.constant 0 : index
    %c0_16 = arith.constant 0 : index
    %22 = vector.load %arg7[%c0_15, %c0_16] : memref<32x64xbf16, #tpu.memory_space<vmem>>, vector<32x64xbf16>
    %cst_17 = arith.constant dense<0.000000e+00> : vector<16x64xf32>
    %23 = tpu.matmul %21, %22, %cst_17 {dimension_numbers = #tpu.dot_dimension_numbers<[1], [0], [0], [1], [0, 0, 1, 1], [], []>} : vector<16x32xbf16>, vector<32x64xbf16>, vector<16x64xf32> -> vector<16x64xf32>
    %24 = arith.addf %20, %23 : vector<16x64xf32>
    %c0_18 = arith.constant 0 : index
    %c0_19 = arith.constant 0 : index
    %25 = vector.load %arg8[%c0_18, %c0_19] : memref<1x64xf32, #tpu.memory_space<vmem>>, vector<1x64xf32>
    %26 = vector.broadcast %25 : vector<1x64xf32> to vector<16x64xf32>
    %27 = arith.addf %24, %26 : vector<16x64xf32>
    %28 = arith.negf %27 : vector<16x64xf32>
    %29 = math.exp %28 : vector<16x64xf32>
    %cst_20 = arith.constant 1.000000e+00 : f32
    %30 = vector.broadcast %cst_20 : f32 to vector<16x64xf32>
    %31 = arith.addf %30, %29 : vector<16x64xf32>
    %32 = arith.divf %30, %31 : vector<16x64xf32>
    %33 = vector.extract_strided_slice %32 {offsets = [0, 0], sizes = [8, 64], strides = [1, 1]} : vector<16x64xf32> to vector<8x64xf32>
    %34 = vector.extract_strided_slice %32 {offsets = [8, 0], sizes = [8, 64], strides = [1, 1]} : vector<16x64xf32> to vector<8x64xf32>
    %35 = vector.extract_strided_slice %33 {offsets = [0, 0], sizes = [8, 32], strides = [1, 1]} : vector<8x64xf32> to vector<8x32xf32>
    %36 = arith.mulf %35, %2 : vector<8x32xf32>
    %37 = arith.truncf %36 : vector<8x32xf32> to vector<8x32xbf16>
    %38 = vector.extract_strided_slice %33 {offsets = [0, 32], sizes = [8, 32], strides = [1, 1]} : vector<8x64xf32> to vector<8x32xf32>
    %39 = arith.mulf %38, %3 : vector<8x32xf32>
    %40 = arith.truncf %39 : vector<8x32xf32> to vector<8x32xbf16>
    %41 = vector.extract_strided_slice %9 {offsets = [0, 0], sizes = [8, 8], strides = [1, 1]} : vector<16x16xbf16> to vector<8x8xbf16>
    %cst_21 = arith.constant dense<0.000000e+00> : vector<8x32xf32>
    %42 = tpu.matmul %41, %37, %cst_21 {dimension_numbers = #tpu.dot_dimension_numbers<[1], [0], [0], [1], [0, 0, 1, 1], [], []>} : vector<8x8xbf16>, vector<8x32xbf16>, vector<8x32xf32> -> vector<8x32xf32>
    %43 = vector.extract_strided_slice %9 {offsets = [0, 8], sizes = [8, 8], strides = [1, 1]} : vector<16x16xbf16> to vector<8x8xbf16>
    %cst_22 = arith.constant dense<0.000000e+00> : vector<8x32xf32>
    %44 = tpu.matmul %43, %40, %cst_22 {dimension_numbers = #tpu.dot_dimension_numbers<[1], [0], [0], [1], [0, 0, 1, 1], [], []>} : vector<8x8xbf16>, vector<8x32xbf16>, vector<8x32xf32> -> vector<8x32xf32>
    %45 = arith.addf %42, %44 : vector<8x32xf32>
    %46 = vector.extract_strided_slice %9 {offsets = [8, 0], sizes = [8, 8], strides = [1, 1]} : vector<16x16xbf16> to vector<8x8xbf16>
    %cst_23 = arith.constant dense<0.000000e+00> : vector<8x32xf32>
    %47 = tpu.matmul %46, %37, %cst_23 {dimension_numbers = #tpu.dot_dimension_numbers<[1], [0], [0], [1], [0, 0, 1, 1], [], []>} : vector<8x8xbf16>, vector<8x32xbf16>, vector<8x32xf32> -> vector<8x32xf32>
    %48 = vector.extract_strided_slice %9 {offsets = [8, 8], sizes = [8, 8], strides = [1, 1]} : vector<16x16xbf16> to vector<8x8xbf16>
    %cst_24 = arith.constant dense<0.000000e+00> : vector<8x32xf32>
    %49 = tpu.matmul %48, %40, %cst_24 {dimension_numbers = #tpu.dot_dimension_numbers<[1], [0], [0], [1], [0, 0, 1, 1], [], []>} : vector<8x8xbf16>, vector<8x32xbf16>, vector<8x32xf32> -> vector<8x32xf32>
    %50 = arith.addf %47, %49 : vector<8x32xf32>
    %c0_25 = arith.constant 0 : index
    %c0_26 = arith.constant 0 : index
    %51 = vector.load %arg9[%c0_25, %c0_26] : memref<1x32xf32, #tpu.memory_space<vmem>>, vector<1x32xf32>
    %c0_27 = arith.constant 0 : index
    %c0_28 = arith.constant 0 : index
    %52 = vector.load %arg11[%c0_27, %c0_28] : memref<1x32xf32, #tpu.memory_space<vmem>>, vector<1x32xf32>
    %53 = vector.extract_strided_slice %7 {offsets = [0, 0], sizes = [8, 1], strides = [1, 1]} : vector<8x2xf32> to vector<8x1xf32>
    %54 = vector.broadcast %53 : vector<8x1xf32> to vector<8x32xf32>
    %55 = vector.broadcast %51 : vector<1x32xf32> to vector<8x32xf32>
    %56 = arith.mulf %54, %55 : vector<8x32xf32>
    %57 = arith.truncf %45 : vector<8x32xf32> to vector<8x32xbf16>
    %c0_29 = arith.constant 0 : index
    %c0_30 = arith.constant 0 : index
    %58 = vector.load %arg10[%c0_29, %c0_30] : memref<32x32xbf16, #tpu.memory_space<vmem>>, vector<32x32xbf16>
    %cst_31 = arith.constant dense<0.000000e+00> : vector<8x32xf32>
    %59 = tpu.matmul %57, %58, %cst_31 {dimension_numbers = #tpu.dot_dimension_numbers<[1], [0], [0], [1], [0, 0, 1, 1], [], []>} : vector<8x32xbf16>, vector<32x32xbf16>, vector<8x32xf32> -> vector<8x32xf32>
    %60 = arith.addf %56, %59 : vector<8x32xf32>
    %61 = vector.broadcast %52 : vector<1x32xf32> to vector<8x32xf32>
    %62 = arith.addf %60, %61 : vector<8x32xf32>
    %63 = math.tanh %62 : vector<8x32xf32>
    %64 = vector.extract_strided_slice %7 {offsets = [0, 1], sizes = [8, 1], strides = [1, 1]} : vector<8x2xf32> to vector<8x1xf32>
    %65 = vector.broadcast %64 : vector<8x1xf32> to vector<8x32xf32>
    %66 = vector.broadcast %51 : vector<1x32xf32> to vector<8x32xf32>
    %67 = arith.mulf %65, %66 : vector<8x32xf32>
    %68 = arith.truncf %50 : vector<8x32xf32> to vector<8x32xbf16>
    %c0_32 = arith.constant 0 : index
    %c0_33 = arith.constant 0 : index
    %69 = vector.load %arg10[%c0_32, %c0_33] : memref<32x32xbf16, #tpu.memory_space<vmem>>, vector<32x32xbf16>
    %cst_34 = arith.constant dense<0.000000e+00> : vector<8x32xf32>
    %70 = tpu.matmul %68, %69, %cst_34 {dimension_numbers = #tpu.dot_dimension_numbers<[1], [0], [0], [1], [0, 0, 1, 1], [], []>} : vector<8x32xbf16>, vector<32x32xbf16>, vector<8x32xf32> -> vector<8x32xf32>
    %71 = arith.addf %67, %70 : vector<8x32xf32>
    %72 = vector.broadcast %52 : vector<1x32xf32> to vector<8x32xf32>
    %73 = arith.addf %71, %72 : vector<8x32xf32>
    %74 = math.tanh %73 : vector<8x32xf32>
    %75 = vector.extract_strided_slice %34 {offsets = [0, 0], sizes = [8, 32], strides = [1, 1]} : vector<8x64xf32> to vector<8x32xf32>
    %76 = vector.extract_strided_slice %34 {offsets = [0, 32], sizes = [8, 32], strides = [1, 1]} : vector<8x64xf32> to vector<8x32xf32>
    %77 = arith.mulf %75, %2 : vector<8x32xf32>
    %cst_35 = arith.constant 1.000000e+00 : f32
    %78 = vector.broadcast %cst_35 : f32 to vector<8x32xf32>
    %79 = arith.subf %78, %75 : vector<8x32xf32>
    %80 = arith.mulf %79, %63 : vector<8x32xf32>
    %81 = arith.addf %77, %80 : vector<8x32xf32>
    %c0_36 = arith.constant 0 : index
    %c0_37 = arith.constant 0 : index
    %c0_38 = arith.constant 0 : index
    %82 = vector.load %arg12[%c0_36, %c0_37, %c0_38] : memref<1x8x64xf32, #tpu.memory_space<vmem>>, vector<1x8x32xf32>
    %83 = vector.shape_cast %82 : vector<1x8x32xf32> to vector<8x32xf32>
    %84 = vector.shape_cast %81 : vector<8x32xf32> to vector<1x8x32xf32>
    tpu.vector_store %arg12[%c0_36, %c0_37, %c0_38], %84 {strides = array<i32>} : memref<1x8x64xf32, #tpu.memory_space<vmem>>, vector<1x8x32xf32>,
    %85 = arith.mulf %76, %3 : vector<8x32xf32>
    %cst_39 = arith.constant 1.000000e+00 : f32
    %86 = vector.broadcast %cst_39 : f32 to vector<8x32xf32>
    %87 = arith.subf %86, %76 : vector<8x32xf32>
    %88 = arith.mulf %87, %74 : vector<8x32xf32>
    %89 = arith.addf %85, %88 : vector<8x32xf32>
    %c0_40 = arith.constant 0 : index
    %c0_41 = arith.constant 0 : index
    %c32 = arith.constant 32 : index
    %90 = vector.load %arg12[%c0_40, %c0_41, %c32] : memref<1x8x64xf32, #tpu.memory_space<vmem>>, vector<1x8x32xf32>
    %91 = vector.shape_cast %90 : vector<1x8x32xf32> to vector<8x32xf32>
    %92 = vector.shape_cast %89 : vector<8x32xf32> to vector<1x8x32xf32>
    tpu.vector_store %arg12[%c0_40, %c0_41, %c32], %92 {strides = array<i32>} : memref<1x8x64xf32, #tpu.memory_space<vmem>>, vector<1x8x32xf32>,
    return
  }
  func.func @transform_0(%arg0: i32) -> (i32, i32, i32) {
    %c0_i32 = arith.constant 0 : i32
    %c0_i32_0 = arith.constant 0 : i32
    %c0_i32_1 = arith.constant 0 : i32
    return %arg0, %c0_i32, %c0_i32_0 : i32, i32, i32
  }
  func.func @transform_1(%arg0: i32) -> (i32, i32, i32) {
    %c0_i32 = arith.constant 0 : i32
    %c0_i32_0 = arith.constant 0 : i32
    %c0_i32_1 = arith.constant 0 : i32
    return %arg0, %c0_i32, %c0_i32_0 : i32, i32, i32
  }
  func.func @transform_2(%arg0: i32) -> (i32, i32, i32) {
    %c0_i32 = arith.constant 0 : i32
    %c0_i32_0 = arith.constant 0 : i32
    %c0_i32_1 = arith.constant 0 : i32
    return %arg0, %c0_i32, %c0_i32_0 : i32, i32, i32
  }
  func.func @transform_3(%arg0: i32) -> (i32, i32) {
    %c0_i32 = arith.constant 0 : i32
    %c0_i32_0 = arith.constant 0 : i32
    %c0_i32_1 = arith.constant 0 : i32
    return %c0_i32, %c0_i32_0 : i32, i32
  }
  func.func @transform_4(%arg0: i32) -> (i32, i32) {
    %c0_i32 = arith.constant 0 : i32
    %c0_i32_0 = arith.constant 0 : i32
    %c0_i32_1 = arith.constant 0 : i32
    return %c0_i32, %c0_i32_0 : i32, i32
  }
  func.func @transform_5(%arg0: i32) -> (i32, i32) {
    %c0_i32 = arith.constant 0 : i32
    %c0_i32_0 = arith.constant 0 : i32
    %c0_i32_1 = arith.constant 0 : i32
    return %c0_i32, %c0_i32_0 : i32, i32
  }
  func.func @transform_6(%arg0: i32) -> (i32, i32) {
    %c0_i32 = arith.constant 0 : i32
    %c0_i32_0 = arith.constant 0 : i32
    %c0_i32_1 = arith.constant 0 : i32
    return %c0_i32, %c0_i32_0 : i32, i32
  }
  func.func @transform_7(%arg0: i32) -> (i32, i32) {
    %c0_i32 = arith.constant 0 : i32
    %c0_i32_0 = arith.constant 0 : i32
    %c0_i32_1 = arith.constant 0 : i32
    return %c0_i32, %c0_i32_0 : i32, i32
  }
  func.func @transform_8(%arg0: i32) -> (i32, i32) {
    %c0_i32 = arith.constant 0 : i32
    %c0_i32_0 = arith.constant 0 : i32
    %c0_i32_1 = arith.constant 0 : i32
    return %c0_i32, %c0_i32_0 : i32, i32
  }
  func.func @transform_9(%arg0: i32) -> (i32, i32) {
    %c0_i32 = arith.constant 0 : i32
    %c0_i32_0 = arith.constant 0 : i32
    %c0_i32_1 = arith.constant 0 : i32
    return %c0_i32, %c0_i32_0 : i32, i32
  }
  func.func @transform_10(%arg0: i32) -> (i32, i32) {
    %c0_i32 = arith.constant 0 : i32
    %c0_i32_0 = arith.constant 0 : i32
    %c0_i32_1 = arith.constant 0 : i32
    return %c0_i32, %c0_i32_0 : i32, i32
  }
  func.func @transform_11(%arg0: i32) -> (i32, i32, i32) {
    %c0_i32 = arith.constant 0 : i32
    %c0_i32_0 = arith.constant 0 : i32
    %c0_i32_1 = arith.constant 0 : i32
    return %arg0, %c0_i32, %c0_i32_0 : i32, i32, i32
  }
}

</mosaic_0001>

<llo_original>
// kernel: tgcn_cell_forward.1
$region0: #{tgcn_cell_forward.1}
  #allocation0 [shape = 'u32[]', space=smem, size = 0x4, offset = 0x4, fixed_abs, tag = 'smem constant byte address 0x4 - core index']
  #allocation1 [shape = 'u32[144,128]{1,0:T(1,128)}', space=vmem, size = 0x12000, scoped, tag = 'internal scratch']
  %s0 = inlined_call_operand.vmem [shape: f32[2,16,1], index: 0, kind: input, shape index: {}]
  %s1 = inlined_call_operand.vmem [shape: f32[2,8,2], index: 1, kind: input, shape index: {}]
  %s2 = inlined_call_operand.vmem [shape: f32[2,8,64], index: 2, kind: input, shape index: {}]
  %s3 = inlined_call_operand.vmem [shape: bf16[16,16], index: 3, kind: input, shape index: {}]
  %s4 = inlined_call_operand.vmem [shape: bf16[16,16], index: 4, kind: input, shape index: {}]
  %s5 = inlined_call_operand.vmem [shape: f32[1,64], index: 5, kind: input, shape index: {}]
  %s6 = inlined_call_operand.vmem [shape: bf16[32,64], index: 6, kind: input, shape index: {}]
  %s7 = inlined_call_operand.vmem [shape: f32[1,64], index: 7, kind: input, shape index: {}]
  %s8 = inlined_call_operand.vmem [shape: f32[1,32], index: 8, kind: input, shape index: {}]
  %s9 = inlined_call_operand.vmem [shape: bf16[32,32], index: 9, kind: input, shape index: {}]
  %s10 = inlined_call_operand.vmem [shape: f32[1,32], index: 10, kind: input, shape index: {}]
  %s11 = inlined_call_operand.vmem [shape: f32[2,8,64], index: 11, kind: output, shape index: {}]
  %s12 = sld [smem:[#allocation0]]
  $region77: #{tgcn_cell_forward.1} parent=0
    _
  %s14 = ssub.s32 1, %s12
  %s15 = scalar_select 0, %s14, %s12
  loop: start=0, step=1, limit=4
  $region2: #{tgcn_cell_forward.1} parent=0 // loop_pre_header
    _
  $region3: #{tgcn_cell_forward.1} parent=0 // loop_header
    %s17 = sphi 0, %s21
    %p18 = scmp.ge.s32.totalorder %s17, 4
    %s27 = sphi 0, %s29
    %s30 = sphi 0, %s27
    %s31 = sphi 0, %s30
    %s47 = sphi 0, %s31
    %s53 = sphi 0, %s55
    %s56 = sphi 0, %s53
    %s57 = sphi 0, %s56
    %s73 = sphi 0, %s57
    %s79 = sphi 0, %s81
    %s82 = sphi 0, %s79
    %s83 = sphi 0, %s82
    %s99 = sphi 0, %s83
    %s103 = sphi 0, %s103
    %s105 = sphi 0, %s103
    %s106 = sphi 0, %s105
    %s120 = sphi 0, %s106
    %s124 = sphi 0, %s124
    %s126 = sphi 0, %s124
    %s127 = sphi 0, %s126
    %s141 = sphi 0, %s127
    %s145 = sphi 0, %s145
    %s147 = sphi 0, %s145
    %s148 = sphi 0, %s147
    %s162 = sphi 0, %s148
    %s166 = sphi 0, %s166
    %s168 = sphi 0, %s166
    %s169 = sphi 0, %s168
    %s183 = sphi 0, %s169
    %s187 = sphi 0, %s187
    %s189 = sphi 0, %s187
    %s190 = sphi 0, %s189
    %s204 = sphi 0, %s190
    %s208 = sphi 0, %s208
    %s210 = sphi 0, %s208
    %s211 = sphi 0, %s210
    %s225 = sphi 0, %s211
    %s229 = sphi 0, %s229
    %s231 = sphi 0, %s229
    %s232 = sphi 0, %s231
    %s246 = sphi 0, %s232
    %s250 = sphi 0, %s250
    %s252 = sphi 0, %s250
    %s253 = sphi 0, %s252
    %s267 = sphi 0, %s253
    %s273 = sphi 0, %s275
    %s276 = sphi 0, %s273
    %s277 = sphi 0, %s276
    %s293 = sphi 0, %s277
  $region4: #{tgcn_cell_forward.1} parent=0 // loop_header_branch
    %20 = sbr.rel (%p18) target = $region8
  $region5: #{tgcn_cell_forward.1} parent=0 // loop_body
    %s22 = ssub.s32 %s17, 1
    %s23 = ssub.s32 %s17, 2
    %s24 = sadd.s32 %s17, 1
    %s25 = ssub.s32 %s17, %s24
    %p26 = scmp.eq.s32.totalorder %s25, 0
    %s28 = sadd.s32 %s27, 1
    %s29 = scalar_select %p26, %s27, %s28
    %p32 = pneg %p26
    %p33 = scmp.eq.s32.totalorder %s17, 1
    %p34 = por %p32, %p33
    %p35 = scmp.ne.s32.totalorder %s27, %s30
    %p36 = scmp.eq.s32.totalorder %s17, 0
    %p37 = por %p35, %p36
    %p38 = scmp.ne.s32.totalorder %s27, %s30
    %p39 = scmp.eq.s32.totalorder %s22, 1
    %p40 = por %p38, %p39
    %p41 = scmp.ne.s32.totalorder %s30, %s31
    %p42 = scmp.eq.s32.totalorder %s22, 0
    %p43 = por %p41, %p42
    %p44 = scmp.ne.s32.totalorder %s30, %s31
    %p45 = scmp.eq.s32.totalorder %s23, 1
    %p46 = por %p44, %p45
    %p48 = scmp.ne.s32.totalorder %s31, %s47
    %p49 = scmp.eq.s32.totalorder %s23, 0
    %p50 = por %p48, %p49
    %s51 = ssub.s32 %s17, %s24
    %p52 = scmp.eq.s32.totalorder %s51, 0
    %s54 = sadd.s32 %s53, 1
    %s55 = scalar_select %p52, %s53, %s54
    %p58 = pneg %p52
    %p59 = scmp.eq.s32.totalorder %s17, 1
    %p60 = por %p58, %p59
    %p61 = scmp.ne.s32.totalorder %s53, %s56
    %p62 = scmp.eq.s32.totalorder %s17, 0
    %p63 = por %p61, %p62
    %p64 = scmp.ne.s32.totalorder %s53, %s56
    %p65 = scmp.eq.s32.totalorder %s22, 1
    %p66 = por %p64, %p65
    %p67 = scmp.ne.s32.totalorder %s56, %s57
    %p68 = scmp.eq.s32.totalorder %s22, 0
    %p69 = por %p67, %p68
    %p70 = scmp.ne.s32.totalorder %s56, %s57
    %p71 = scmp.eq.s32.totalorder %s23, 1
    %p72 = por %p70, %p71
    %p74 = scmp.ne.s32.totalorder %s57, %s73
    %p75 = scmp.eq.s32.totalorder %s23, 0
    %p76 = por %p74, %p75
    %s77 = ssub.s32 %s17, %s24
    %p78 = scmp.eq.s32.totalorder %s77, 0
    %s80 = sadd.s32 %s79, 1
    %s81 = scalar_select %p78, %s79, %s80
    %p84 = pneg %p78
    %p85 = scmp.eq.s32.totalorder %s17, 1
    %p86 = por %p84, %p85
    %p87 = scmp.ne.s32.totalorder %s79, %s82
    %p88 = scmp.eq.s32.totalorder %s17, 0
    %p89 = por %p87, %p88
    %p90 = scmp.ne.s32.totalorder %s79, %s82
    %p91 = scmp.eq.s32.totalorder %s22, 1
    %p92 = por %p90, %p91
    %p93 = scmp.ne.s32.totalorder %s82, %s83
    %p94 = scmp.eq.s32.totalorder %s22, 0
    %p95 = por %p93, %p94
    %p96 = scmp.ne.s32.totalorder %s82, %s83
    %p97 = scmp.eq.s32.totalorder %s23, 1
    %p98 = por %p96, %p97
    %p100 = scmp.ne.s32.totalorder %s83, %s99
    %p101 = scmp.eq.s32.totalorder %s23, 0
    %p102 = por %p100, %p101
    %s104 = sadd.s32 %s103, 1
    %p107 = scmp.eq.s32.totalorder %s17, 1
    %p108 = scmp.ne.s32.totalorder %s103, %s105
    %p109 = scmp.eq.s32.totalorder %s17, 0
    %p110 = por %p108, %p109
    %p111 = scmp.ne.s32.totalorder %s103, %s105
    %p112 = scmp.eq.s32.totalorder %s22, 1
    %p113 = por %p111, %p112
    %p114 = scmp.ne.s32.totalorder %s105, %s106
    %p115 = scmp.eq.s32.totalorder %s22, 0
    %p116 = por %p114, %p115
    %p117 = scmp.ne.s32.totalorder %s105, %s106
    %p118 = scmp.eq.s32.totalorder %s23, 1
    %p119 = por %p117, %p118
    %p121 = scmp.ne.s32.totalorder %s106, %s120
    %p122 = scmp.eq.s32.totalorder %s23, 0
    %p123 = por %p121, %p122
    %s125 = sadd.s32 %s124, 1
    %p128 = scmp.eq.s32.totalorder %s17, 1
    %p129 = scmp.ne.s32.totalorder %s124, %s126
    %p130 = scmp.eq.s32.totalorder %s17, 0
    %p131 = por %p129, %p130
    %p132 = scmp.ne.s32.totalorder %s124, %s126
    %p133 = scmp.eq.s32.totalorder %s22, 1
    %p134 = por %p132, %p133
    %p135 = scmp.ne.s32.totalorder %s126, %s127
    %p136 = scmp.eq.s32.totalorder %s22, 0
    %p137 = por %p135, %p136
    %p138 = scmp.ne.s32.totalorder %s126, %s127
    %p139 = scmp.eq.s32.totalorder %s23, 1
    %p140 = por %p138, %p139
    %p142 = scmp.ne.s32.totalorder %s127, %s141
    %p143 = scmp.eq.s32.totalorder %s23, 0
    %p144 = por %p142, %p143
    %s146 = sadd.s32 %s145, 1
    %p149 = scmp.eq.s32.totalorder %s17, 1
    %p150 = scmp.ne.s32.totalorder %s145, %s147
    %p151 = scmp.eq.s32.totalorder %s17, 0
    %p152 = por %p150, %p151
    %p153 = scmp.ne.s32.totalorder %s145, %s147
    %p154 = scmp.eq.s32.totalorder %s22, 1
    %p155 = por %p153, %p154
    %p156 = scmp.ne.s32.totalorder %s147, %s148
    %p157 = scmp.eq.s32.totalorder %s22, 0
    %p158 = por %p156, %p157
    %p159 = scmp.ne.s32.totalorder %s147, %s148
    %p160 = scmp.eq.s32.totalorder %s23, 1
    %p161 = por %p159, %p160
    %p163 = scmp.ne.s32.totalorder %s148, %s162
    %p164 = scmp.eq.s32.totalorder %s23, 0
    %p165 = por %p163, %p164
    %s167 = sadd.s32 %s166, 1
    %p170 = scmp.eq.s32.totalorder %s17, 1
    %p171 = scmp.ne.s32.totalorder %s166, %s168
    %p172 = scmp.eq.s32.totalorder %s17, 0
    %p173 = por %p171, %p172
    %p174 = scmp.ne.s32.totalorder %s166, %s168
    %p175 = scmp.eq.s32.totalorder %s22, 1
    %p176 = por %p174, %p175
    %p177 = scmp.ne.s32.totalorder %s168, %s169
    %p178 = scmp.eq.s32.totalorder %s22, 0
    %p179 = por %p177, %p178
    %p180 = scmp.ne.s32.totalorder %s168, %s169
    %p181 = scmp.eq.s32.totalorder %s23, 1
    %p182 = por %p180, %p181
    %p184 = scmp.ne.s32.totalorder %s169, %s183
    %p185 = scmp.eq.s32.totalorder %s23, 0
    %p186 = por %p184, %p185
    %s188 = sadd.s32 %s187, 1
    %p191 = scmp.eq.s32.totalorder %s17, 1
    %p192 = scmp.ne.s32.totalorder %s187, %s189
    %p193 = scmp.eq.s32.totalorder %s17, 0
    %p194 = por %p192, %p193
    %p195 = scmp.ne.s32.totalorder %s187, %s189
    %p196 = scmp.eq.s32.totalorder %s22, 1
    %p197 = por %p195, %p196
    %p198 = scmp.ne.s32.totalorder %s189, %s190
    %p199 = scmp.eq.s32.totalorder %s22, 0
    %p200 = por %p198, %p199
    %p201 = scmp.ne.s32.totalorder %s189, %s190
    %p202 = scmp.eq.s32.totalorder %s23, 1
    %p203 = por %p201, %p202
    %p205 = scmp.ne.s32.totalorder %s190, %s204
    %p206 = scmp.eq.s32.totalorder %s23, 0
    %p207 = por %p205, %p206
    %s209 = sadd.s32 %s208, 1
    %p212 = scmp.eq.s32.totalorder %s17, 1
    %p213 = scmp.ne.s32.totalorder %s208, %s210
    %p214 = scmp.eq.s32.totalorder %s17, 0
    %p215 = por %p213, %p214
    %p216 = scmp.ne.s32.totalorder %s208, %s210
    %p217 = scmp.eq.s32.totalorder %s22, 1
    %p218 = por %p216, %p217
    %p219 = scmp.ne.s32.totalorder %s210, %s211
    %p220 = scmp.eq.s32.totalorder %s22, 0
    %p221 = por %p219, %p220
    %p222 = scmp.ne.s32.totalorder %s210, %s211
    %p223 = scmp.eq.s32.totalorder %s23, 1
    %p224 = por %p222, %p223
    %p226 = scmp.ne.s32.totalorder %s211, %s225
    %p227 = scmp.eq.s32.totalorder %s23, 0
    %p228 = por %p226, %p227
    %s230 = sadd.s32 %s229, 1
    %p233 = scmp.eq.s32.totalorder %s17, 1
    %p234 = scmp.ne.s32.totalorder %s229, %s231
    %p235 = scmp.eq.s32.totalorder %s17, 0
    %p236 = por %p234, %p235
    %p237 = scmp.ne.s32.totalorder %s229, %s231
    %p238 = scmp.eq.s32.totalorder %s22, 1
    %p239 = por %p237, %p238
    %p240 = scmp.ne.s32.totalorder %s231, %s232
    %p241 = scmp.eq.s32.totalorder %s22, 0
    %p242 = por %p240, %p241
    %p243 = scmp.ne.s32.totalorder %s231, %s232
    %p244 = scmp.eq.s32.totalorder %s23, 1
    %p245 = por %p243, %p244
    %p247 = scmp.ne.s32.totalorder %s232, %s246
    %p248 = scmp.eq.s32.totalorder %s23, 0
    %p249 = por %p247, %p248
    %s251 = sadd.s32 %s250, 1
    %p254 = scmp.eq.s32.totalorder %s17, 1
    %p255 = scmp.ne.s32.totalorder %s250, %s252
    %p256 = scmp.eq.s32.totalorder %s17, 0
    %p257 = por %p255, %p256
    %p258 = scmp.ne.s32.totalorder %s250, %s252
    %p259 = scmp.eq.s32.totalorder %s22, 1
    %p260 = por %p258, %p259
    %p261 = scmp.ne.s32.totalorder %s252, %s253
    %p262 = scmp.eq.s32.totalorder %s22, 0
    %p263 = por %p261, %p262
    %p264 = scmp.ne.s32.totalorder %s252, %s253
    %p265 = scmp.eq.s32.totalorder %s23, 1
    %p266 = por %p264, %p265
    %p268 = scmp.ne.s32.totalorder %s253, %s267
    %p269 = scmp.eq.s32.totalorder %s23, 0
    %p270 = por %p268, %p269
    %s271 = ssub.s32 %s17, %s24
    %p272 = scmp.eq.s32.totalorder %s271, 0
    %s274 = sadd.s32 %s273, 1
    %s275 = scalar_select %p272, %s273, %s274
    %p278 = pneg %p272
    %p279 = scmp.eq.s32.totalorder %s17, 1
    %p280 = por %p278, %p279
    %p281 = scmp.ne.s32.totalorder %s273, %s276
    %p282 = scmp.eq.s32.totalorder %s17, 0
    %p283 = por %p281, %p282
    %p284 = scmp.ne.s32.totalorder %s273, %s276
    %p285 = scmp.eq.s32.totalorder %s22, 1
    %p286 = por %p284, %p285
    %p287 = scmp.ne.s32.totalorder %s276, %s277
    %p288 = scmp.eq.s32.totalorder %s22, 0
    %p289 = por %p287, %p288
    %p290 = scmp.ne.s32.totalorder %s276, %s277
    %p291 = scmp.eq.s32.totalorder %s23, 1
    %p292 = por %p290, %p291
    %p294 = scmp.ne.s32.totalorder %s277, %s293
    %p295 = scmp.eq.s32.totalorder %s23, 0
    %p296 = por %p294, %p295
    %p297 = scmp.le.s32.totalorder 1, %s17
    %p298 = scmp.lt.s32.totalorder %s17, 3
    %p299 = pnand %p297, %p298
    %p300 = pneg %p299
    // Predicated region
    $region9: #{tgcn_cell_forward.1} parent=5 // pred_check
      _
    $region10: #{tgcn_cell_forward.1} parent=5 // pred_check_branch
      %302 = sbr.rel (%p299) target = $region12
    $region11: #{tgcn_cell_forward.1} parent=5 // pred_region
      %s303 = ssub.s32 %s17, 1
      // Predicated region
      $region13: #{tgcn_cell_forward.1} parent=11 // pred_check
        %p304 = pneg %p116
      $region14: #{tgcn_cell_forward.1} parent=11 // pred_check_branch
        %306 = sbr.rel (%p304) target = $region16
      $region15: #{tgcn_cell_forward.1} parent=11 // pred_region
        _
      $region16: #{tgcn_cell_forward.1} parent=11 // pred_fallthru
        _
      // Predicated region
      $region17: #{tgcn_cell_forward.1} parent=11 // pred_check
        %p307 = pneg %p137
      $region18: #{tgcn_cell_forward.1} parent=11 // pred_check_branch
        %309 = sbr.rel (%p307) target = $region20
      $region19: #{tgcn_cell_forward.1} parent=11 // pred_region
        _
      $region20: #{tgcn_cell_forward.1} parent=11 // pred_fallthru
        _
      // Predicated region
      $region21: #{tgcn_cell_forward.1} parent=11 // pred_check
        %p310 = pneg %p158
      $region22: #{tgcn_cell_forward.1} parent=11 // pred_check_branch
        %312 = sbr.rel (%p310) target = $region24
      $region23: #{tgcn_cell_forward.1} parent=11 // pred_region
        _
      $region24: #{tgcn_cell_forward.1} parent=11 // pred_fallthru
        _
      // Predicated region
      $region25: #{tgcn_cell_forward.1} parent=11 // pred_check
        %p313 = pneg %p179
      $region26: #{tgcn_cell_forward.1} parent=11 // pred_check_branch
        %315 = sbr.rel (%p313) target = $region28
      $region27: #{tgcn_cell_forward.1} parent=11 // pred_region
        _
      $region28: #{tgcn_cell_forward.1} parent=11 // pred_fallthru
        _
      // Predicated region
      $region29: #{tgcn_cell_forward.1} parent=11 // pred_check
        %p316 = pneg %p200
      $region30: #{tgcn_cell_forward.1} parent=11 // pred_check_branch
        %318 = sbr.rel (%p316) target = $region32
      $region31: #{tgcn_cell_forward.1} parent=11 // pred_region
        _
      $region32: #{tgcn_cell_forward.1} parent=11 // pred_fallthru
        _
      // Predicated region
      $region33: #{tgcn_cell_forward.1} parent=11 // pred_check
        %p319 = pneg %p221
      $region34: #{tgcn_cell_forward.1} parent=11 // pred_check_branch
        %321 = sbr.rel (%p319) target = $region36
      $region35: #{tgcn_cell_forward.1} parent=11 // pred_region
        _
      $region36: #{tgcn_cell_forward.1} parent=11 // pred_fallthru
        _
      // Predicated region
      $region37: #{tgcn_cell_forward.1} parent=11 // pred_check
        %p322 = pneg %p242
      $region38: #{tgcn_cell_forward.1} parent=11 // pred_check_branch
        %324 = sbr.rel (%p322) target = $region40
      $region39: #{tgcn_cell_forward.1} parent=11 // pred_region
        _
      $region40: #{tgcn_cell_forward.1} parent=11 // pred_fallthru
        _
      // Predicated region
      $region41: #{tgcn_cell_forward.1} parent=11 // pred_check
        %p325 = pneg %p263
      $region42: #{tgcn_cell_forward.1} parent=11 // pred_check_branch
        %327 = sbr.rel (%p325) target = $region44
      $region43: #{tgcn_cell_forward.1} parent=11 // pred_region
        _
      $region44: #{tgcn_cell_forward.1} parent=11 // pred_fallthru
        _
    $region12: #{tgcn_cell_forward.1} parent=5 // pred_fallthru
      _
    %p328 = scmp.lt.s32.totalorder %s17, 2
    // Predicated region
    $region45: #{tgcn_cell_forward.1} parent=5 // pred_check
      %p329 = pneg %p328
    $region46: #{tgcn_cell_forward.1} parent=5 // pred_check_branch
      %331 = sbr.rel (%p329) target = $region48
    $region47: #{tgcn_cell_forward.1} parent=5 // pred_region
      // Predicated region
      $region49: #{tgcn_cell_forward.1} parent=47 // pred_check
        %p332 = pneg %p37
      $region50: #{tgcn_cell_forward.1} parent=47 // pred_check_branch
        %334 = sbr.rel (%p332) target = $region52
      $region51: #{tgcn_cell_forward.1} parent=47 // pred_region
        %p335 = scmp.lt.s32.totalorder %s17, 1
        %s336 = scalar_select %p335, %s17, 1
        %s337 = smul.addr %s336, 2
        %s338 = smul.addr %s337, 8
        %s339 = scalar_lea.vmem %s0, %s338
      $region52: #{tgcn_cell_forward.1} parent=47 // pred_fallthru
        _
      // Predicated region
      $region53: #{tgcn_cell_forward.1} parent=47 // pred_check
        %p340 = pneg %p63
      $region54: #{tgcn_cell_forward.1} parent=47 // pred_check_branch
        %342 = sbr.rel (%p340) target = $region56
      $region55: #{tgcn_cell_forward.1} parent=47 // pred_region
        %p343 = scmp.lt.s32.totalorder %s17, 1
        %s344 = scalar_select %p343, %s17, 1
        %s345 = smul.addr %s344, 8
        %s346 = scalar_lea.vmem %s1, %s345
      $region56: #{tgcn_cell_forward.1} parent=47 // pred_fallthru
        _
      // Predicated region
      $region57: #{tgcn_cell_forward.1} parent=47 // pred_check
        %p347 = pneg %p89
      $region58: #{tgcn_cell_forward.1} parent=47 // pred_check_branch
        %349 = sbr.rel (%p347) target = $region60
      $region59: #{tgcn_cell_forward.1} parent=47 // pred_region
        %p350 = scmp.lt.s32.totalorder %s17, 1
        %s351 = scalar_select %p350, %s17, 1
        %s352 = smul.addr %s351, 8
        %s353 = scalar_lea.vmem %s2, %s352
      $region60: #{tgcn_cell_forward.1} parent=47 // pred_fallthru
        _
    $region48: #{tgcn_cell_forward.1} parent=5 // pred_fallthru
      _
    %p354 = scmp.le.s32.totalorder 1, %s17
    %p355 = scmp.lt.s32.totalorder %s17, 3
    %p356 = pnand %p354, %p355
    %p357 = pneg %p356
    // Predicated region
    $region61: #{tgcn_cell_forward.1} parent=5 // pred_check
      _
    $region62: #{tgcn_cell_forward.1} parent=5 // pred_check_branch
      %359 = sbr.rel (%p356) target = $region64
    $region63: #{tgcn_cell_forward.1} parent=5 // pred_region
      %s360 = ssub.s32 %s17, 1
      %p361 = scmp.lt.s32.totalorder %s22, 1
      %s362 = scalar_select %p361, %s22, 1
      %s363 = smul.addr %s362, 2
      %s364 = smul.addr %s363, 8
      %s365 = scalar_lea.vmem %s0, %s364
      %p366 = pneg %p43
      %p367 = pneg %p40
      %p368 = scmp.lt.s32.totalorder %s22, 1
      %s369 = scalar_select %p368, %s22, 1
      %s370 = smul.addr %s369, 8
      %s371 = scalar_lea.vmem %s1, %s370
      %p372 = pneg %p69
      %p373 = pneg %p66
      %p374 = scmp.lt.s32.totalorder %s22, 1
      %s375 = scalar_select %p374, %s22, 1
      %s376 = smul.addr %s375, 8
      %s377 = scalar_lea.vmem %s2, %s376
      %p378 = pneg %p95
      %p379 = pneg %p92
      %p380 = pneg %p116
      %p381 = pneg %p113
      %p382 = pneg %p137
      %p383 = pneg %p134
      %p384 = pneg %p158
      %p385 = pneg %p155
      %p386 = pneg %p179
      %p387 = pneg %p176
      %p388 = pneg %p200
      %p389 = pneg %p197
      %p390 = pneg %p221
      %p391 = pneg %p218
      %p392 = pneg %p242
      %p393 = pneg %p239
      %p394 = pneg %p263
      %p395 = pneg %p260
      %p396 = pneg %p289
      %p397 = pneg %p286
      %p398 = scmp.lt.s32.totalorder %s22, 1
      %s399 = scalar_select %p398, %s22, 1
      %s400 = smul.addr %s399, 8
      %s401 = scalar_lea.vmem %s11, %s400
      %p402 = scmp.lt.s32.totalorder %s22, 1
      %s403 = scalar_select %p402, %s22, 1
      %s404 = smul.addr %s403, 2
      %s405 = smul.addr %s404, 8
      %s406 = scalar_lea.vmem %s0, %s405
      %p407 = scmp.lt.s32.totalorder %s22, 1
      %s408 = scalar_select %p407, %s22, 1
      %s409 = smul.addr %s408, 8
      %s410 = scalar_lea.vmem %s1, %s409
      %p411 = scmp.lt.s32.totalorder %s22, 1
      %s412 = scalar_select %p411, %s22, 1
      %s413 = smul.addr %s412, 8
      %s414 = scalar_lea.vmem %s2, %s413
      %p415 = scmp.lt.s32.totalorder %s22, 1
      %s416 = scalar_select %p415, %s22, 1
      %s417 = smul.addr %s416, 8
      %s418 = scalar_lea.vmem %s11, %s417
      %v420 = vld [vmem:[%s414] sm:$0xff]
      %v421 = vld [vmem:[%s406] sm:$0xff]
      %v422 = vld [vmem:[%s406 + $0x8] sm:$0xff]
      %v423 = vld [vmem:[%s410] sm:$0xff]
      %v424 = vld [vmem:[%s3] sm:$0xf]
      %v425 = vld [vmem:[%s3 + $0x4] sm:$0xf]
      %v426 = vld [vmem:[%s4] sm:$0xf]
      %v427 = vld [vmem:[%s4 + $0x4] sm:$0xf]
      %v428 = vpack.c.bf16 %v420, %v420
      %v431 = vunpack.c.l.b16 %v424
      %v432 = vunpack.c.l.b16 %v425
      %v433 = vpack.c.b16 %v432, %v431
      %434 = vrot.lane.b32.xlu0 %v433, 120
      %v435 = vpop.permute.xlu0 %434
      %437 = vrot.lane.b32.xlu0 %v428, 96
      %v438 = vpop.permute.xlu0 %437
      %vm439 = vcmask 64512
      %v441 = vsel %vm439, %v435, 0
      %vm443 = vcmask 1043456
      %v445 = vsel %vm443, %v438, 0
      %447 = vmatprep.subr.bf16.mxu0 0
      %448 = vmatpush1.bf16.msra.mxu0 %v445
      %449 = vmatprep.subr.bf16.mxu0 0
      %450 = vmatpush1.bf16.msra.mxu0 0
      %451 = vmatprep.subr.bf16.mxu0 0
      %452 = vmatpush1.bf16.msra.mxu0 0
      %453 = vmatprep.subr.bf16.mxu0 0
      %454 = vmatpush1.bf16.msra.mxu0 0
      %455 = vmatprep.subr.bf16.mxu0 0
      %456 = vmatpush1.bf16.msra.mxu0 0
      %457 = vmatprep.subr.bf16.mxu0 0
      %458 = vmatpush1.bf16.msra.mxu0 0
      %459 = vmatprep.subr.bf16.mxu0 0
      %460 = vmatpush1.bf16.msra.mxu0 0
      %461 = vmatprep.subr.bf16.mxu0 0
      %462 = vmatpush1.bf16.msra.mxu0 0
      %463 = vmatprep.subr.bf16.mxu0 0
      %464 = vmatpush1.bf16.msra.mxu0 0
      %465 = vmatprep.subr.bf16.mxu0 0
      %466 = vmatpush1.bf16.msra.mxu0 0
      %467 = vmatprep.subr.bf16.mxu0 0
      %468 = vmatpush1.bf16.msra.mxu0 0
      %469 = vmatprep.subr.bf16.mxu0 0
      %470 = vmatpush1.bf16.msra.mxu0 0
      %471 = vmatprep.subr.bf16.mxu0 0
      %472 = vmatpush1.bf16.msra.mxu0 0
      %473 = vmatprep.subr.bf16.mxu0 0
      %474 = vmatpush1.bf16.msra.mxu0 0
      %475 = vmatprep.subr.bf16.mxu0 0
      %476 = vmatpush1.bf16.msra.mxu0 0
      %477 = vmatprep.subr.bf16.mxu0 0
      %478 = vmatpush1.bf16.msra.mxu0 0
      %479 = vmatprep.mubr.bf16.mxu0 0
      %480 = vmatmul.mubr.bf16.gmra.mrb[0].mxu0 %v441
      %v481 = vpop.f32.mrb[0].mxu0
      %v482 = vadd.f32 0.0, %v481
      %v483 = vpop.f32.mrb[0].mxu0
      %v484 = vpop.f32.mrb[0].mxu0
      %v485 = vadd.f32 0.0, %v484
      %v486 = vpop.f32.mrb[0].mxu0
      %487 = vdwg.mxu0
      %v489 = vsel %vm439, %v433, 0
      %v492 = vsel %vm443, %v428, 0
      %494 = vmatprep.subr.bf16.mxu0 0
      %495 = vmatpush1.bf16.msra.mxu0 %v492
      %496 = vmatprep.subr.bf16.mxu0 0
      %497 = vmatpush1.bf16.msra.mxu0 0
      %498 = vmatprep.subr.bf16.mxu0 0
      %499 = vmatpush1.bf16.msra.mxu0 0
      %500 = vmatprep.subr.bf16.mxu0 0
      %501 = vmatpush1.bf16.msra.mxu0 0
      %502 = vmatprep.subr.bf16.mxu0 0
      %503 = vmatpush1.bf16.msra.mxu0 0
      %504 = vmatprep.subr.bf16.mxu0 0
      %505 = vmatpush1.bf16.msra.mxu0 0
      %506 = vmatprep.subr.bf16.mxu0 0
      %507 = vmatpush1.bf16.msra.mxu0 0
      %508 = vmatprep.subr.bf16.mxu0 0
      %509 = vmatpush1.bf16.msra.mxu0 0
      %510 = vmatprep.subr.bf16.mxu0 0
      %511 = vmatpush1.bf16.msra.mxu0 0
      %512 = vmatprep.subr.bf16.mxu0 0
      %513 = vmatpush1.bf16.msra.mxu0 0
      %514 = vmatprep.subr.bf16.mxu0 0
      %515 = vmatpush1.bf16.msra.mxu0 0
      %516 = vmatprep.subr.bf16.mxu0 0
      %517 = vmatpush1.bf16.msra.mxu0 0
      %518 = vmatprep.subr.bf16.mxu0 0
      %519 = vmatpush1.bf16.msra.mxu0 0
      %520 = vmatprep.subr.bf16.mxu0 0
      %521 = vmatpush1.bf16.msra.mxu0 0
      %522 = vmatprep.subr.bf16.mxu0 0
      %523 = vmatpush1.bf16.msra.mxu0 0
      %524 = vmatprep.subr.bf16.mxu0 0
      %525 = vmatpush1.bf16.msra.mxu0 0
      %526 = vmatprep.mubr.bf16.mxu0 0
      %527 = vmatmul.mubr.bf16.gmra.mrb[0].mxu0 %v489
      %v528 = vpop.f32.mrb[0].mxu0
      %v529 = vadd.f32 %v482, %v528
      %v530 = vpop.f32.mrb[0].mxu0
      %v531 = vpop.f32.mrb[0].mxu0
      %v532 = vadd.f32 %v485, %v531
      %v533 = vpop.f32.mrb[0].mxu0
      %534 = vdwg.mxu0
      %v535 = vld [vmem:[%s5] sm:$0x1]
      %537 = vset.pattern.permute.xlu0 0
      %538 = vperm.xlu0 %537, %v421
      %v539 = vpop.permute.xlu0 %538
      %542 = vset.pattern.permute.xlu0 0
      %543 = vperm.xlu0 %542, %v422
      %v544 = vpop.permute.xlu0 %543
      %v547 = vlaneseq
      %v548 = vshrl.u32 %v547, 7
      %v549 = vsub.s32 0, %v548
      %v550 = vrot.slane %v535, %v549
      %v552 = vmul.f32 %v539, %v550
      %v553 = vmul.f32 %v544, %v550
      %v554 = vpack.c.bf16 %v532, %v529
      %v555 = vld [vmem:[%s6] sm:$0xf]
      %v556 = vld [vmem:[%s6 + $0x4] sm:$0xf]
      %v557 = vld [vmem:[%s6 + $0x8] sm:$0xf]
      %v558 = vld [vmem:[%s6 + $0xc] sm:$0xf]
      %v563 = vunpack.c.l.b16 %v555
      %v564 = vunpack.c.l.b16 %v556
      %v565 = vunpack.c.l.b16 %v557
      %v566 = vunpack.c.l.b16 %v558
      %v567 = vpack.c.b16 %v564, %v563
      %v568 = vpack.c.b16 %v566, %v565
      %vm571 = vcmask 261120
      %v573 = vsel %vm571, %v554, 0
      %575 = vmatprep.subr.bf16.mxu0 0
      %576 = vmatpush1.bf16.msra.mxu0 %v567
      %577 = vmatprep.subr.bf16.mxu0 0
      %578 = vmatpush1.bf16.msra.mxu0 %v568
      %579 = vmatprep.subr.bf16.mxu0 0
      %580 = vmatpush1.bf16.msra.mxu0 0
      %581 = vmatprep.subr.bf16.mxu0 0
      %582 = vmatpush1.bf16.msra.mxu0 0
      %583 = vmatprep.subr.bf16.mxu0 0
      %584 = vmatpush1.bf16.msra.mxu0 0
      %585 = vmatprep.subr.bf16.mxu0 0
      %586 = vmatpush1.bf16.msra.mxu0 0
      %587 = vmatprep.subr.bf16.mxu0 0
      %588 = vmatpush1.bf16.msra.mxu0 0
      %589 = vmatprep.subr.bf16.mxu0 0
      %590 = vmatpush1.bf16.msra.mxu0 0
      %591 = vmatprep.subr.bf16.mxu0 0
      %592 = vmatpush1.bf16.msra.mxu0 0
      %593 = vmatprep.subr.bf16.mxu0 0
      %594 = vmatpush1.bf16.msra.mxu0 0
      %595 = vmatprep.subr.bf16.mxu0 0
      %596 = vmatpush1.bf16.msra.mxu0 0
      %597 = vmatprep.subr.bf16.mxu0 0
      %598 = vmatpush1.bf16.msra.mxu0 0
      %599 = vmatprep.subr.bf16.mxu0 0
      %600 = vmatpush1.bf16.msra.mxu0 0
      %601 = vmatprep.subr.bf16.mxu0 0
      %602 = vmatpush1.bf16.msra.mxu0 0
      %603 = vmatprep.subr.bf16.mxu0 0
      %604 = vmatpush1.bf16.msra.mxu0 0
      %605 = vmatprep.subr.bf16.mxu0 0
      %606 = vmatpush1.bf16.msra.mxu0 0
      %607 = vmatprep.mubr.bf16.mxu0 0
      %608 = vmatmul.mubr.bf16.gmra.mrb[0].mxu0 %v573
      %v609 = vpop.f32.mrb[0].mxu0
      %v610 = vadd.f32 0.0, %v609
      %v611 = vpop.f32.mrb[0].mxu0
      %v612 = vpop.f32.mrb[0].mxu0
      %v613 = vadd.f32 0.0, %v612
      %v614 = vpop.f32.mrb[0].mxu0
      %615 = vdwg.mxu0
      %v616 = vadd.f32 %v552, %v610
      %v617 = vadd.f32 %v553, %v613
      %v618 = vld [vmem:[%s7] sm:$0x1]
      %v620 = vlaneseq
      %v621 = vshrl.u32 %v620, 7
      %v622 = vsub.s32 0, %v621
      %v623 = vrot.slane %v618, %v622
      %v625 = vadd.f32 %v616, %v623
      %v626 = vadd.f32 %v617, %v623
      %v627 = vxor.u32 %v625, 2147483648
      %v628 = vxor.u32 %v626, 2147483648
      %v629 = vmul.f32 %v627, 1.442695
      %v630 = vpow.pop %v629
      %v631 = vmul.f32 %v628, 1.442695
      %v632 = vpow.pop %v631
      %v633 = vadd.f32 %v630, 1.0
      %v634 = vadd.f32 %v632, 1.0
      %v635 = vrcp.pop %v633
      %v636 = vmul.f32 1.0, %v635
      %v637 = vrcp.pop %v634
      %v638 = vmul.f32 1.0, %v637
      %v639 = vmul.f32 %v636, %v420
      %v640 = vpack.c.bf16 %v639, %v639
      %v642 = vunpack.c.l.b16 %v426
      %v643 = vpack.c.b16 %v642, %v642
      %644 = vrot.lane.b32.xlu0 %v643, 120
      %v645 = vpop.permute.xlu0 %644
      %647 = vrot.lane.b32.xlu0 %v640, 96
      %v648 = vpop.permute.xlu0 %647
      %v650 = vsel %vm439, %v645, 0
      %v653 = vsel %vm443, %v648, 0
      %655 = vmatprep.subr.bf16.mxu0 0
      %656 = vmatpush1.bf16.msra.mxu0 %v653
      %657 = vmatprep.subr.bf16.mxu0 0
      %658 = vmatpush1.bf16.msra.mxu0 0
      %659 = vmatprep.subr.bf16.mxu0 0
      %660 = vmatpush1.bf16.msra.mxu0 0
      %661 = vmatprep.subr.bf16.mxu0 0
      %662 = vmatpush1.bf16.msra.mxu0 0
      %663 = vmatprep.subr.bf16.mxu0 0
      %664 = vmatpush1.bf16.msra.mxu0 0
      %665 = vmatprep.subr.bf16.mxu0 0
      %666 = vmatpush1.bf16.msra.mxu0 0
      %667 = vmatprep.subr.bf16.mxu0 0
      %668 = vmatpush1.bf16.msra.mxu0 0
      %669 = vmatprep.subr.bf16.mxu0 0
      %670 = vmatpush1.bf16.msra.mxu0 0
      %671 = vmatprep.subr.bf16.mxu0 0
      %672 = vmatpush1.bf16.msra.mxu0 0
      %673 = vmatprep.subr.bf16.mxu0 0
      %674 = vmatpush1.bf16.msra.mxu0 0
      %675 = vmatprep.subr.bf16.mxu0 0
      %676 = vmatpush1.bf16.msra.mxu0 0
      %677 = vmatprep.subr.bf16.mxu0 0
      %678 = vmatpush1.bf16.msra.mxu0 0
      %679 = vmatprep.subr.bf16.mxu0 0
      %680 = vmatpush1.bf16.msra.mxu0 0
      %681 = vmatprep.subr.bf16.mxu0 0
      %682 = vmatpush1.bf16.msra.mxu0 0
      %683 = vmatprep.subr.bf16.mxu0 0
      %684 = vmatpush1.bf16.msra.mxu0 0
      %685 = vmatprep.subr.bf16.mxu0 0
      %686 = vmatpush1.bf16.msra.mxu0 0
      %687 = vmatprep.mubr.bf16.mxu0 0
      %688 = vmatmul.mubr.bf16.gmra.mrb[0].mxu0 %v650
      %v689 = vpop.f32.mrb[0].mxu0
      %v690 = vadd.f32 0.0, %v689
      %v691 = vpop.f32.mrb[0].mxu0
      %v692 = vpop.f32.mrb[0].mxu0
      %v693 = vpop.f32.mrb[0].mxu0
      %694 = vdwg.mxu0
      %v696 = vsel %vm439, %v426, 0
      %v699 = vsel %vm443, %v640, 0
      %701 = vmatprep.subr.bf16.mxu0 0
      %702 = vmatpush1.bf16.msra.mxu0 %v699
      %703 = vmatprep.subr.bf16.mxu0 0
      %704 = vmatpush1.bf16.msra.mxu0 0
      %705 = vmatprep.subr.bf16.mxu0 0
      %706 = vmatpush1.bf16.msra.mxu0 0
      %707 = vmatprep.subr.bf16.mxu0 0
      %708 = vmatpush1.bf16.msra.mxu0 0
      %709 = vmatprep.subr.bf16.mxu0 0
      %710 = vmatpush1.bf16.msra.mxu0 0
      %711 = vmatprep.subr.bf16.mxu0 0
      %712 = vmatpush1.bf16.msra.mxu0 0
      %713 = vmatprep.subr.bf16.mxu0 0
      %714 = vmatpush1.bf16.msra.mxu0 0
      %715 = vmatprep.subr.bf16.mxu0 0
      %716 = vmatpush1.bf16.msra.mxu0 0
      %717 = vmatprep.subr.bf16.mxu0 0
      %718 = vmatpush1.bf16.msra.mxu0 0
      %719 = vmatprep.subr.bf16.mxu0 0
      %720 = vmatpush1.bf16.msra.mxu0 0
      %721 = vmatprep.subr.bf16.mxu0 0
      %722 = vmatpush1.bf16.msra.mxu0 0
      %723 = vmatprep.subr.bf16.mxu0 0
      %724 = vmatpush1.bf16.msra.mxu0 0
      %725 = vmatprep.subr.bf16.mxu0 0
      %726 = vmatpush1.bf16.msra.mxu0 0
      %727 = vmatprep.subr.bf16.mxu0 0
      %728 = vmatpush1.bf16.msra.mxu0 0
      %729 = vmatprep.subr.bf16.mxu0 0
      %730 = vmatpush1.bf16.msra.mxu0 0
      %731 = vmatprep.subr.bf16.mxu0 0
      %732 = vmatpush1.bf16.msra.mxu0 0
      %733 = vmatprep.mubr.bf16.mxu0 0
      %734 = vmatmul.mubr.bf16.gmra.mrb[0].mxu0 %v696
      %v735 = vpop.f32.mrb[0].mxu0
      %v736 = vadd.f32 %v690, %v735
      %v737 = vpop.f32.mrb[0].mxu0
      %v738 = vpop.f32.mrb[0].mxu0
      %v739 = vpop.f32.mrb[0].mxu0
      %740 = vdwg.mxu0
      %v742 = vunpack.c.l.b16 %v427
      %v743 = vpack.c.b16 %v742, %v742
      %744 = vrot.lane.b32.xlu0 %v743, 120
      %v745 = vpop.permute.xlu0 %744
      %v747 = vsel %vm439, %v745, 0
      %749 = vmatprep.subr.bf16.mxu0 0
      %750 = vmatpush1.bf16.msra.mxu0 %v653
      %751 = vmatprep.subr.bf16.mxu0 0
      %752 = vmatpush1.bf16.msra.mxu0 0
      %753 = vmatprep.subr.bf16.mxu0 0
      %754 = vmatpush1.bf16.msra.mxu0 0
      %755 = vmatprep.subr.bf16.mxu0 0
      %756 = vmatpush1.bf16.msra.mxu0 0
      %757 = vmatprep.subr.bf16.mxu0 0
      %758 = vmatpush1.bf16.msra.mxu0 0
      %759 = vmatprep.subr.bf16.mxu0 0
      %760 = vmatpush1.bf16.msra.mxu0 0
      %761 = vmatprep.subr.bf16.mxu0 0
      %762 = vmatpush1.bf16.msra.mxu0 0
      %763 = vmatprep.subr.bf16.mxu0 0
      %764 = vmatpush1.bf16.msra.mxu0 0
      %765 = vmatprep.subr.bf16.mxu0 0
      %766 = vmatpush1.bf16.msra.mxu0 0
      %767 = vmatprep.subr.bf16.mxu0 0
      %768 = vmatpush1.bf16.msra.mxu0 0
      %769 = vmatprep.subr.bf16.mxu0 0
      %770 = vmatpush1.bf16.msra.mxu0 0
      %771 = vmatprep.subr.bf16.mxu0 0
      %772 = vmatpush1.bf16.msra.mxu0 0
      %773 = vmatprep.subr.bf16.mxu0 0
      %774 = vmatpush1.bf16.msra.mxu0 0
      %775 = vmatprep.subr.bf16.mxu0 0
      %776 = vmatpush1.bf16.msra.mxu0 0
      %777 = vmatprep.subr.bf16.mxu0 0
      %778 = vmatpush1.bf16.msra.mxu0 0
      %779 = vmatprep.subr.bf16.mxu0 0
      %780 = vmatpush1.bf16.msra.mxu0 0
      %781 = vmatprep.mubr.bf16.mxu0 0
      %782 = vmatmul.mubr.bf16.gmra.mrb[0].mxu0 %v747
      %v783 = vpop.f32.mrb[0].mxu0
      %v784 = vadd.f32 0.0, %v783
      %v785 = vpop.f32.mrb[0].mxu0
      %v786 = vpop.f32.mrb[0].mxu0
      %v787 = vpop.f32.mrb[0].mxu0
      %788 = vdwg.mxu0
      %v790 = vsel %vm439, %v427, 0
      %792 = vmatprep.subr.bf16.mxu0 0
      %793 = vmatpush1.bf16.msra.mxu0 %v699
      %794 = vmatprep.subr.bf16.mxu0 0
      %795 = vmatpush1.bf16.msra.mxu0 0
      %796 = vmatprep.subr.bf16.mxu0 0
      %797 = vmatpush1.bf16.msra.mxu0 0
      %798 = vmatprep.subr.bf16.mxu0 0
      %799 = vmatpush1.bf16.msra.mxu0 0
      %800 = vmatprep.subr.bf16.mxu0 0
      %801 = vmatpush1.bf16.msra.mxu0 0
      %802 = vmatprep.subr.bf16.mxu0 0
      %803 = vmatpush1.bf16.msra.mxu0 0
      %804 = vmatprep.subr.bf16.mxu0 0
      %805 = vmatpush1.bf16.msra.mxu0 0
      %806 = vmatprep.subr.bf16.mxu0 0
      %807 = vmatpush1.bf16.msra.mxu0 0
      %808 = vmatprep.subr.bf16.mxu0 0
      %809 = vmatpush1.bf16.msra.mxu0 0
      %810 = vmatprep.subr.bf16.mxu0 0
      %811 = vmatpush1.bf16.msra.mxu0 0
      %812 = vmatprep.subr.bf16.mxu0 0
      %813 = vmatpush1.bf16.msra.mxu0 0
      %814 = vmatprep.subr.bf16.mxu0 0
      %815 = vmatpush1.bf16.msra.mxu0 0
      %816 = vmatprep.subr.bf16.mxu0 0
      %817 = vmatpush1.bf16.msra.mxu0 0
      %818 = vmatprep.subr.bf16.mxu0 0
      %819 = vmatpush1.bf16.msra.mxu0 0
      %820 = vmatprep.subr.bf16.mxu0 0
      %821 = vmatpush1.bf16.msra.mxu0 0
      %822 = vmatprep.subr.bf16.mxu0 0
      %823 = vmatpush1.bf16.msra.mxu0 0
      %824 = vmatprep.mubr.bf16.mxu0 0
      %825 = vmatmul.mubr.bf16.gmra.mrb[0].mxu0 %v790
      %v826 = vpop.f32.mrb[0].mxu0
      %v827 = vadd.f32 %v784, %v826
      %v828 = vpop.f32.mrb[0].mxu0
      %v829 = vpop.f32.mrb[0].mxu0
      %v830 = vpop.f32.mrb[0].mxu0
      %831 = vdwg.mxu0
      %v832 = vld [vmem:[%s8] sm:$0x1]
      %v833 = vld [vmem:[%s10] sm:$0x1]
      %835 = vset.pattern.permute.xlu0 0
      %836 = vperm.xlu0 %835, %v423
      %v837 = vpop.permute.xlu0 %836
      %v840 = vlaneseq
      %v841 = vshrl.u32 %v840, 7
      %v842 = vsub.s32 0, %v841
      %v843 = vrot.slane %v832, %v842
      %v845 = vmul.f32 %v837, %v843
      %v846 = vpack.c.bf16 %v736, %v736
      %v847 = vld [vmem:[%s9] sm:$0xf]
      %v848 = vld [vmem:[%s9 + $0x4] sm:$0xf]
      %v849 = vld [vmem:[%s9 + $0x8] sm:$0xf]
      %v850 = vld [vmem:[%s9 + $0xc] sm:$0xf]
      %v855 = vunpack.c.l.b16 %v847
      %v856 = vunpack.c.l.b16 %v848
      %v857 = vunpack.c.l.b16 %v849
      %v858 = vunpack.c.l.b16 %v850
      %v859 = vpack.c.b16 %v856, %v855
      %v860 = vpack.c.b16 %v858, %v857
      %v864 = vsel %vm571, %v846, 0
      %866 = vmatprep.subr.bf16.mxu0 0
      %867 = vmatpush1.bf16.msra.mxu0 %v859
      %868 = vmatprep.subr.bf16.mxu0 0
      %869 = vmatpush1.bf16.msra.mxu0 %v860
      %870 = vmatprep.subr.bf16.mxu0 0
      %871 = vmatpush1.bf16.msra.mxu0 0
      %872 = vmatprep.subr.bf16.mxu0 0
      %873 = vmatpush1.bf16.msra.mxu0 0
      %874 = vmatprep.subr.bf16.mxu0 0
      %875 = vmatpush1.bf16.msra.mxu0 0
      %876 = vmatprep.subr.bf16.mxu0 0
      %877 = vmatpush1.bf16.msra.mxu0 0
      %878 = vmatprep.subr.bf16.mxu0 0
      %879 = vmatpush1.bf16.msra.mxu0 0
      %880 = vmatprep.subr.bf16.mxu0 0
      %881 = vmatpush1.bf16.msra.mxu0 0
      %882 = vmatprep.subr.bf16.mxu0 0
      %883 = vmatpush1.bf16.msra.mxu0 0
      %884 = vmatprep.subr.bf16.mxu0 0
      %885 = vmatpush1.bf16.msra.mxu0 0
      %886 = vmatprep.subr.bf16.mxu0 0
      %887 = vmatpush1.bf16.msra.mxu0 0
      %888 = vmatprep.subr.bf16.mxu0 0
      %889 = vmatpush1.bf16.msra.mxu0 0
      %890 = vmatprep.subr.bf16.mxu0 0
      %891 = vmatpush1.bf16.msra.mxu0 0
      %892 = vmatprep.subr.bf16.mxu0 0
      %893 = vmatpush1.bf16.msra.mxu0 0
      %894 = vmatprep.subr.bf16.mxu0 0
      %895 = vmatpush1.bf16.msra.mxu0 0
      %896 = vmatprep.subr.bf16.mxu0 0
      %897 = vmatpush1.bf16.msra.mxu0 0
      %898 = vmatprep.mubr.bf16.mxu0 0
      %899 = vmatmul.mubr.bf16.gmra.mrb[0].mxu0 %v864
      %v900 = vpop.f32.mrb[0].mxu0
      %v901 = vadd.f32 0.0, %v900
      %v902 = vpop.f32.mrb[0].mxu0
      %v903 = vpop.f32.mrb[0].mxu0
      %v904 = vpop.f32.mrb[0].mxu0
      %905 = vdwg.mxu0
      %v906 = vadd.f32 %v845, %v901
      %v908 = vlaneseq
      %v909 = vshrl.u32 %v908, 7
      %v910 = vsub.s32 0, %v909
      %v911 = vrot.slane %v833, %v910
      %v913 = vadd.f32 %v906, %v911
      %v914 = vtanh.pop %v913
      %915 = vset.pattern.permute.xlu0 1
      %916 = vperm.xlu0 %915, %v423
      %v917 = vpop.permute.xlu0 %916
      %v919 = vmul.f32 %v917, %v843
      %v920 = vpack.c.bf16 %v827, %v827
      %v922 = vsel %vm571, %v920, 0
      %924 = vmatprep.subr.bf16.mxu0 0
      %925 = vmatpush1.bf16.msra.mxu0 %v859
      %926 = vmatprep.subr.bf16.mxu0 0
      %927 = vmatpush1.bf16.msra.mxu0 %v860
      %928 = vmatprep.subr.bf16.mxu0 0
      %929 = vmatpush1.bf16.msra.mxu0 0
      %930 = vmatprep.subr.bf16.mxu0 0
      %931 = vmatpush1.bf16.msra.mxu0 0
      %932 = vmatprep.subr.bf16.mxu0 0
      %933 = vmatpush1.bf16.msra.mxu0 0
      %934 = vmatprep.subr.bf16.mxu0 0
      %935 = vmatpush1.bf16.msra.mxu0 0
      %936 = vmatprep.subr.bf16.mxu0 0
      %937 = vmatpush1.bf16.msra.mxu0 0
      %938 = vmatprep.subr.bf16.mxu0 0
      %939 = vmatpush1.bf16.msra.mxu0 0
      %940 = vmatprep.subr.bf16.mxu0 0
      %941 = vmatpush1.bf16.msra.mxu0 0
      %942 = vmatprep.subr.bf16.mxu0 0
      %943 = vmatpush1.bf16.msra.mxu0 0
      %944 = vmatprep.subr.bf16.mxu0 0
      %945 = vmatpush1.bf16.msra.mxu0 0
      %946 = vmatprep.subr.bf16.mxu0 0
      %947 = vmatpush1.bf16.msra.mxu0 0
      %948 = vmatprep.subr.bf16.mxu0 0
      %949 = vmatpush1.bf16.msra.mxu0 0
      %950 = vmatprep.subr.bf16.mxu0 0
      %951 = vmatpush1.bf16.msra.mxu0 0
      %952 = vmatprep.subr.bf16.mxu0 0
      %953 = vmatpush1.bf16.msra.mxu0 0
      %954 = vmatprep.subr.bf16.mxu0 0
      %955 = vmatpush1.bf16.msra.mxu0 0
      %956 = vmatprep.mubr.bf16.mxu0 0
      %957 = vmatmul.mubr.bf16.gmra.mrb[0].mxu0 %v922
      %v958 = vpop.f32.mrb[0].mxu0
      %v959 = vadd.f32 0.0, %v958
      %v960 = vpop.f32.mrb[0].mxu0
      %v961 = vpop.f32.mrb[0].mxu0
      %v962 = vpop.f32.mrb[0].mxu0
      %963 = vdwg.mxu0
      %v964 = vadd.f32 %v919, %v959
      %v965 = vadd.f32 %v964, %v911
      %v966 = vtanh.pop %v965
      %v967 = vmul.f32 %v638, %v420
      %v968 = vsub.f32 1.0, %v638
      %v969 = vmul.f32 %v968, %v914
      %v970 = vadd.f32 %v967, %v969
      %971 = vst.msk [vmem:[%s418] sm:$0xff] %vm571, %v970
      %973 = vrot.lane.b32.xlu0 %v966, 32
      %v974 = vpop.permute.xlu0 %973
      %v976 = vmul.f32 %v968, %v974
      %v977 = vadd.f32 %v967, %v976
      %vm978 = vcmask 523520
      %979 = vst.msk [vmem:[%s418] sm:$0xff] %vm978, %v977
      %p980 = scmp.lt.s32.totalorder %s22, 1
      %s981 = scalar_select %p980, %s22, 1
      %s982 = smul.addr %s981, 8
      %s983 = scalar_lea.vmem %s11, %s982
      // Predicated region
      $region65: #{tgcn_cell_forward.1} parent=63 // pred_check
        %p984 = pneg %p286
      $region66: #{tgcn_cell_forward.1} parent=63 // pred_check_branch
        %986 = sbr.rel (%p984) target = $region68
      $region67: #{tgcn_cell_forward.1} parent=63 // pred_region
        _
      $region68: #{tgcn_cell_forward.1} parent=63 // pred_fallthru
        _
    $region64: #{tgcn_cell_forward.1} parent=5 // pred_fallthru
      _
    %p987 = scmp.le.s32.totalorder 2, %s17
    // Predicated region
    $region69: #{tgcn_cell_forward.1} parent=5 // pred_check
      %p988 = pneg %p987
    $region70: #{tgcn_cell_forward.1} parent=5 // pred_check_branch
      %990 = sbr.rel (%p988) target = $region72
    $region71: #{tgcn_cell_forward.1} parent=5 // pred_region
      %s991 = ssub.s32 %s17, 2
      // Predicated region
      $region73: #{tgcn_cell_forward.1} parent=71 // pred_check
        %p992 = pneg %p292
      $region74: #{tgcn_cell_forward.1} parent=71 // pred_check_branch
        %994 = sbr.rel (%p992) target = $region76
      $region75: #{tgcn_cell_forward.1} parent=71 // pred_region
        %p995 = scmp.lt.s32.totalorder %s23, 1
        %s996 = scalar_select %p995, %s23, 1
        %s997 = smul.addr %s996, 8
        %s998 = scalar_lea.vmem %s11, %s997
      $region76: #{tgcn_cell_forward.1} parent=71 // pred_fallthru
        _
    $region72: #{tgcn_cell_forward.1} parent=5 // pred_fallthru
      _
  $region6: #{tgcn_cell_forward.1} parent=0 // loop_footer
    %s21 = sadd.s32 1, %s17
  $region7: #{tgcn_cell_forward.1} parent=0 // loop_footer_branch
    %16 = sbr.rel target = $region3
  $region8: #{tgcn_cell_forward.1} parent=0 // loop_exit
    _

// kernel: tgcn_cell_forward.1
$region0: #{tgcn_cell_forward.1}
  #allocation0 [shape = 'u32[]', space=smem, size = 0x4, offset = 0x4, fixed_abs, tag = 'smem constant byte address 0x4 - core index']
  #allocation1 [shape = 'u32[144,128]{1,0:T(1,128)}', space=vmem, size = 0x12000, scoped, tag = 'internal scratch']
  %s0 = inlined_call_operand.vmem [shape: f32[2,16,1], index: 0, kind: input, shape index: {}]
  %s1 = inlined_call_operand.vmem [shape: f32[2,8,2], index: 1, kind: input, shape index: {}]
  %s2 = inlined_call_operand.vmem [shape: f32[2,8,64], index: 2, kind: input, shape index: {}]
  %s3 = inlined_call_operand.vmem [shape: bf16[16,16], index: 3, kind: input, shape index: {}]
  %s4 = inlined_call_operand.vmem [shape: bf16[16,16], index: 4, kind: input, shape index: {}]
  %s5 = inlined_call_operand.vmem [shape: f32[1,64], index: 5, kind: input, shape index: {}]
  %s6 = inlined_call_operand.vmem [shape: bf16[32,64], index: 6, kind: input, shape index: {}]
  %s7 = inlined_call_operand.vmem [shape: f32[1,64], index: 7, kind: input, shape index: {}]
  %s8 = inlined_call_operand.vmem [shape: f32[1,32], index: 8, kind: input, shape index: {}]
  %s9 = inlined_call_operand.vmem [shape: bf16[32,32], index: 9, kind: input, shape index: {}]
  %s10 = inlined_call_operand.vmem [shape: f32[1,32], index: 10, kind: input, shape index: {}]
  %s11 = inlined_call_operand.vmem [shape: f32[2,8,64], index: 11, kind: output, shape index: {}]
  %s12 = sld [smem:[#allocation0]]
  $region77: #{tgcn_cell_forward.1} parent=0
    _
  %s14 = ssub.s32 1, %s12
  %s15 = scalar_select 0, %s14, %s12
  loop: start=0, step=1, limit=4
  $region2: #{tgcn_cell_forward.1} parent=0 // loop_pre_header
    _
  $region3: #{tgcn_cell_forward.1} parent=0 // loop_header
    %s17 = sphi 0, %s21
    %p18 = scmp.ge.s32.totalorder %s17, 4
    %s27 = sphi 0, %s29
    %s30 = sphi 0, %s27
    %s31 = sphi 0, %s30
    %s47 = sphi 0, %s31
    %s53 = sphi 0, %s55
    %s56 = sphi 0, %s53
    %s57 = sphi 0, %s56
    %s73 = sphi 0, %s57
    %s79 = sphi 0, %s81
    %s82 = sphi 0, %s79
    %s83 = sphi 0, %s82
    %s99 = sphi 0, %s83
    %s103 = sphi 0, %s103
    %s105 = sphi 0, %s103
    %s106 = sphi 0, %s105
    %s120 = sphi 0, %s106
    %s124 = sphi 0, %s124
    %s126 = sphi 0, %s124
    %s127 = sphi 0, %s126
    %s141 = sphi 0, %s127
    %s145 = sphi 0, %s145
    %s147 = sphi 0, %s145
    %s148 = sphi 0, %s147
    %s162 = sphi 0, %s148
    %s166 = sphi 0, %s166
    %s168 = sphi 0, %s166
    %s169 = sphi 0, %s168
    %s183 = sphi 0, %s169
    %s187 = sphi 0, %s187
    %s189 = sphi 0, %s187
    %s190 = sphi 0, %s189
    %s204 = sphi 0, %s190
    %s208 = sphi 0, %s208
    %s210 = sphi 0, %s208
    %s211 = sphi 0, %s210
    %s225 = sphi 0, %s211
    %s229 = sphi 0, %s229
    %s231 = sphi 0, %s229
    %s232 = sphi 0, %s231
    %s246 = sphi 0, %s232
    %s250 = sphi 0, %s250
    %s252 = sphi 0, %s250
    %s253 = sphi 0, %s252
    %s267 = sphi 0, %s253
    %s273 = sphi 0, %s275
    %s276 = sphi 0, %s273
    %s277 = sphi 0, %s276
    %s293 = sphi 0, %s277
  $region4: #{tgcn_cell_forward.1} parent=0 // loop_header_branch
    %20 = sbr.rel (%p18) target = $region8
  $region5: #{tgcn_cell_forward.1} parent=0 // loop_body
    %s22 = ssub.s32 %s17, 1
    %s23 = ssub.s32 %s17, 2
    %s24 = sadd.s32 %s17, 1
    %s25 = ssub.s32 %s17, %s24
    %p26 = scmp.eq.s32.totalorder %s25, 0
    %s28 = sadd.s32 %s27, 1
    %s29 = scalar_select %p26, %s27, %s28
    %p32 = pneg %p26
    %p33 = scmp.eq.s32.totalorder %s17, 1
    %p34 = por %p32, %p33
    %p35 = scmp.ne.s32.totalorder %s27, %s30
    %p36 = scmp.eq.s32.totalorder %s17, 0
    %p37 = por %p35, %p36
    %p38 = scmp.ne.s32.totalorder %s27, %s30
    %p39 = scmp.eq.s32.totalorder %s22, 1
    %p40 = por %p38, %p39
    %p41 = scmp.ne.s32.totalorder %s30, %s31
    %p42 = scmp.eq.s32.totalorder %s22, 0
    %p43 = por %p41, %p42
    %p44 = scmp.ne.s32.totalorder %s30, %s31
    %p45 = scmp.eq.s32.totalorder %s23, 1
    %p46 = por %p44, %p45
    %p48 = scmp.ne.s32.totalorder %s31, %s47
    %p49 = scmp.eq.s32.totalorder %s23, 0
    %p50 = por %p48, %p49
    %s51 = ssub.s32 %s17, %s24
    %p52 = scmp.eq.s32.totalorder %s51, 0
    %s54 = sadd.s32 %s53, 1
    %s55 = scalar_select %p52, %s53, %s54
    %p58 = pneg %p52
    %p59 = scmp.eq.s32.totalorder %s17, 1
    %p60 = por %p58, %p59
    %p61 = scmp.ne.s32.totalorder %s53, %s56
    %p62 = scmp.eq.s32.totalorder %s17, 0
    %p63 = por %p61, %p62
    %p64 = scmp.ne.s32.totalorder %s53, %s56
    %p65 = scmp.eq.s32.totalorder %s22, 1
    %p66 = por %p64, %p65
    %p67 = scmp.ne.s32.totalorder %s56, %s57
    %p68 = scmp.eq.s32.totalorder %s22, 0
    %p69 = por %p67, %p68
    %p70 = scmp.ne.s32.totalorder %s56, %s57
    %p71 = scmp.eq.s32.totalorder %s23, 1
    %p72 = por %p70, %p71
    %p74 = scmp.ne.s32.totalorder %s57, %s73
    %p75 = scmp.eq.s32.totalorder %s23, 0
    %p76 = por %p74, %p75
    %s77 = ssub.s32 %s17, %s24
    %p78 = scmp.eq.s32.totalorder %s77, 0
    %s80 = sadd.s32 %s79, 1
    %s81 = scalar_select %p78, %s79, %s80
    %p84 = pneg %p78
    %p85 = scmp.eq.s32.totalorder %s17, 1
    %p86 = por %p84, %p85
    %p87 = scmp.ne.s32.totalorder %s79, %s82
    %p88 = scmp.eq.s32.totalorder %s17, 0
    %p89 = por %p87, %p88
    %p90 = scmp.ne.s32.totalorder %s79, %s82
    %p91 = scmp.eq.s32.totalorder %s22, 1
    %p92 = por %p90, %p91
    %p93 = scmp.ne.s32.totalorder %s82, %s83
    %p94 = scmp.eq.s32.totalorder %s22, 0
    %p95 = por %p93, %p94
    %p96 = scmp.ne.s32.totalorder %s82, %s83
    %p97 = scmp.eq.s32.totalorder %s23, 1
    %p98 = por %p96, %p97
    %p100 = scmp.ne.s32.totalorder %s83, %s99
    %p101 = scmp.eq.s32.totalorder %s23, 0
    %p102 = por %p100, %p101
    %s104 = sadd.s32 %s103, 1
    %p107 = scmp.eq.s32.totalorder %s17, 1
    %p108 = scmp.ne.s32.totalorder %s103, %s105
    %p109 = scmp.eq.s32.totalorder %s17, 0
    %p110 = por %p108, %p109
    %p111 = scmp.ne.s32.totalorder %s103, %s105
    %p112 = scmp.eq.s32.totalorder %s22, 1
    %p113 = por %p111, %p112
    %p114 = scmp.ne.s32.totalorder %s105, %s106
    %p115 = scmp.eq.s32.totalorder %s22, 0
    %p116 = por %p114, %p115
    %p117 = scmp.ne.s32.totalorder %s105, %s106
    %p118 = scmp.eq.s32.totalorder %s23, 1
    %p119 = por %p117, %p118
    %p121 = scmp.ne.s32.totalorder %s106, %s120
    %p122 = scmp.eq.s32.totalorder %s23, 0
    %p123 = por %p121, %p122
    %s125 = sadd.s32 %s124, 1
    %p128 = scmp.eq.s32.totalorder %s17, 1
    %p129 = scmp.ne.s32.totalorder %s124, %s126
    %p130 = scmp.eq.s32.totalorder %s17, 0
    %p131 = por %p129, %p130
    %p132 = scmp.ne.s32.totalorder %s124, %s126
    %p133 = scmp.eq.s32.totalorder %s22, 1
    %p134 = por %p132, %p133
    %p135 = scmp.ne.s32.totalorder %s126, %s127
    %p136 = scmp.eq.s32.totalorder %s22, 0
    %p137 = por %p135, %p136
    %p138 = scmp.ne.s32.totalorder %s126, %s127
    %p139 = scmp.eq.s32.totalorder %s23, 1
    %p140 = por %p138, %p139
    %p142 = scmp.ne.s32.totalorder %s127, %s141
    %p143 = scmp.eq.s32.totalorder %s23, 0
    %p144 = por %p142, %p143
    %s146 = sadd.s32 %s145, 1
    %p149 = scmp.eq.s32.totalorder %s17, 1
    %p150 = scmp.ne.s32.totalorder %s145, %s147
    %p151 = scmp.eq.s32.totalorder %s17, 0
    %p152 = por %p150, %p151
    %p153 = scmp.ne.s32.totalorder %s145, %s147
    %p154 = scmp.eq.s32.totalorder %s22, 1
    %p155 = por %p153, %p154
    %p156 = scmp.ne.s32.totalorder %s147, %s148
    %p157 = scmp.eq.s32.totalorder %s22, 0
    %p158 = por %p156, %p157
    %p159 = scmp.ne.s32.totalorder %s147, %s148
    %p160 = scmp.eq.s32.totalorder %s23, 1
    %p161 = por %p159, %p160
    %p163 = scmp.ne.s32.totalorder %s148, %s162
    %p164 = scmp.eq.s32.totalorder %s23, 0
    %p165 = por %p163, %p164
    %s167 = sadd.s32 %s166, 1
    %p170 = scmp.eq.s32.totalorder %s17, 1
    %p171 = scmp.ne.s32.totalorder %s166, %s168
    %p172 = scmp.eq.s32.totalorder %s17, 0
    %p173 = por %p171, %p172
    %p174 = scmp.ne.s32.totalorder %s166, %s168
    %p175 = scmp.eq.s32.totalorder %s22, 1
    %p176 = por %p174, %p175
    %p177 = scmp.ne.s32.totalorder %s168, %s169
    %p178 = scmp.eq.s32.totalorder %s22, 0
    %p179 = por %p177, %p178
    %p180 = scmp.ne.s32.totalorder %s168, %s169
    %p181 = scmp.eq.s32.totalorder %s23, 1
    %p182 = por %p180, %p181
    %p184 = scmp.ne.s32.totalorder %s169, %s183
    %p185 = scmp.eq.s32.totalorder %s23, 0
    %p186 = por %p184, %p185
    %s188 = sadd.s32 %s187, 1
    %p191 = scmp.eq.s32.totalorder %s17, 1
    %p192 = scmp.ne.s32.totalorder %s187, %s189
    %p193 = scmp.eq.s32.totalorder %s17, 0
    %p194 = por %p192, %p193
    %p195 = scmp.ne.s32.totalorder %s187, %s189
    %p196 = scmp.eq.s32.totalorder %s22, 1
    %p197 = por %p195, %p196
    %p198 = scmp.ne.s32.totalorder %s189, %s190
    %p199 = scmp.eq.s32.totalorder %s22, 0
    %p200 = por %p198, %p199
    %p201 = scmp.ne.s32.totalorder %s189, %s190
    %p202 = scmp.eq.s32.totalorder %s23, 1
    %p203 = por %p201, %p202
    %p205 = scmp.ne.s32.totalorder %s190, %s204
    %p206 = scmp.eq.s32.totalorder %s23, 0
    %p207 = por %p205, %p206
    %s209 = sadd.s32 %s208, 1
    %p212 = scmp.eq.s32.totalorder %s17, 1
    %p213 = scmp.ne.s32.totalorder %s208, %s210
    %p214 = scmp.eq.s32.totalorder %s17, 0
    %p215 = por %p213, %p214
    %p216 = scmp.ne.s32.totalorder %s208, %s210
    %p217 = scmp.eq.s32.totalorder %s22, 1
    %p218 = por %p216, %p217
    %p219 = scmp.ne.s32.totalorder %s210, %s211
    %p220 = scmp.eq.s32.totalorder %s22, 0
    %p221 = por %p219, %p220
    %p222 = scmp.ne.s32.totalorder %s210, %s211
    %p223 = scmp.eq.s32.totalorder %s23, 1
    %p224 = por %p222, %p223
    %p226 = scmp.ne.s32.totalorder %s211, %s225
    %p227 = scmp.eq.s32.totalorder %s23, 0
    %p228 = por %p226, %p227
    %s230 = sadd.s32 %s229, 1
    %p233 = scmp.eq.s32.totalorder %s17, 1
    %p234 = scmp.ne.s32.totalorder %s229, %s231
    %p235 = scmp.eq.s32.totalorder %s17, 0
    %p236 = por %p234, %p235
    %p237 = scmp.ne.s32.totalorder %s229, %s231
    %p238 = scmp.eq.s32.totalorder %s22, 1
    %p239 = por %p237, %p238
    %p240 = scmp.ne.s32.totalorder %s231, %s232
    %p241 = scmp.eq.s32.totalorder %s22, 0
    %p242 = por %p240, %p241
    %p243 = scmp.ne.s32.totalorder %s231, %s232
    %p244 = scmp.eq.s32.totalorder %s23, 1
    %p245 = por %p243, %p244
    %p247 = scmp.ne.s32.totalorder %s232, %s246
    %p248 = scmp.eq.s32.totalorder %s23, 0
    %p249 = por %p247, %p248
    %s251 = sadd.s32 %s250, 1
    %p254 = scmp.eq.s32.totalorder %s17, 1
    %p255 = scmp.ne.s32.totalorder %s250, %s252
    %p256 = scmp.eq.s32.totalorder %s17, 0
    %p257 = por %p255, %p256
    %p258 = scmp.ne.s32.totalorder %s250, %s252
    %p259 = scmp.eq.s32.totalorder %s22, 1
    %p260 = por %p258, %p259
    %p261 = scmp.ne.s32.totalorder %s252, %s253
    %p262 = scmp.eq.s32.totalorder %s22, 0
    %p263 = por %p261, %p262
    %p264 = scmp.ne.s32.totalorder %s252, %s253
    %p265 = scmp.eq.s32.totalorder %s23, 1
    %p266 = por %p264, %p265
    %p268 = scmp.ne.s32.totalorder %s253, %s267
    %p269 = scmp.eq.s32.totalorder %s23, 0
    %p270 = por %p268, %p269
    %s271 = ssub.s32 %s17, %s24
    %p272 = scmp.eq.s32.totalorder %s271, 0
    %s274 = sadd.s32 %s273, 1
    %s275 = scalar_select %p272, %s273, %s274
    %p278 = pneg %p272
    %p279 = scmp.eq.s32.totalorder %s17, 1
    %p280 = por %p278, %p279
    %p281 = scmp.ne.s32.totalorder %s273, %s276
    %p282 = scmp.eq.s32.totalorder %s17, 0
    %p283 = por %p281, %p282
    %p284 = scmp.ne.s32.totalorder %s273, %s276
    %p285 = scmp.eq.s32.totalorder %s22, 1
    %p286 = por %p284, %p285
    %p287 = scmp.ne.s32.totalorder %s276, %s277
    %p288 = scmp.eq.s32.totalorder %s22, 0
    %p289 = por %p287, %p288
    %p290 = scmp.ne.s32.totalorder %s276, %s277
    %p291 = scmp.eq.s32.totalorder %s23, 1
    %p292 = por %p290, %p291
    %p294 = scmp.ne.s32.totalorder %s277, %s293
    %p295 = scmp.eq.s32.totalorder %s23, 0
    %p296 = por %p294, %p295
    %p297 = scmp.le.s32.totalorder 1, %s17
    %p298 = scmp.lt.s32.totalorder %s17, 3
    %p299 = pnand %p297, %p298
    %p300 = pneg %p299
    // Predicated region
    $region9: #{tgcn_cell_forward.1} parent=5 // pred_check
      _
    $region10: #{tgcn_cell_forward.1} parent=5 // pred_check_branch
      %302 = sbr.rel (%p299) target = $region12
    $region11: #{tgcn_cell_forward.1} parent=5 // pred_region
      %s303 = ssub.s32 %s17, 1
      // Predicated region
      $region13: #{tgcn_cell_forward.1} parent=11 // pred_check
        %p304 = pneg %p116
      $region14: #{tgcn_cell_forward.1} parent=11 // pred_check_branch
        %306 = sbr.rel (%p304) target = $region16
      $region15: #{tgcn_cell_forward.1} parent=11 // pred_region
        _
      $region16: #{tgcn_cell_forward.1} parent=11 // pred_fallthru
        _
      // Predicated region
      $region17: #{tgcn_cell_forward.1} parent=11 // pred_check
        %p307 = pneg %p137
      $region18: #{tgcn_cell_forward.1} parent=11 // pred_check_branch
        %309 = sbr.rel (%p307) target = $region20
      $region19: #{tgcn_cell_forward.1} parent=11 // pred_region
        _
      $region20: #{tgcn_cell_forward.1} parent=11 // pred_fallthru
        _
      // Predicated region
      $region21: #{tgcn_cell_forward.1} parent=11 // pred_check
        %p310 = pneg %p158
      $region22: #{tgcn_cell_forward.1} parent=11 // pred_check_branch
        %312 = sbr.rel (%p310) target = $region24
      $region23: #{tgcn_cell_forward.1} parent=11 // pred_region
        _
      $region24: #{tgcn_cell_forward.1} parent=11 // pred_fallthru
        _
      // Predicated region
      $region25: #{tgcn_cell_forward.1} parent=11 // pred_check
        %p313 = pneg %p179
      $region26: #{tgcn_cell_forward.1} parent=11 // pred_check_branch
        %315 = sbr.rel (%p313) target = $region28
      $region27: #{tgcn_cell_forward.1} parent=11 // pred_region
        _
      $region28: #{tgcn_cell_forward.1} parent=11 // pred_fallthru
        _
      // Predicated region
      $region29: #{tgcn_cell_forward.1} parent=11 // pred_check
        %p316 = pneg %p200
      $region30: #{tgcn_cell_forward.1} parent=11 // pred_check_branch
        %318 = sbr.rel (%p316) target = $region32
      $region31: #{tgcn_cell_forward.1} parent=11 // pred_region
        _
      $region32: #{tgcn_cell_forward.1} parent=11 // pred_fallthru
        _
      // Predicated region
      $region33: #{tgcn_cell_forward.1} parent=11 // pred_check
        %p319 = pneg %p221
      $region34: #{tgcn_cell_forward.1} parent=11 // pred_check_branch
        %321 = sbr.rel (%p319) target = $region36
      $region35: #{tgcn_cell_forward.1} parent=11 // pred_region
        _
      $region36: #{tgcn_cell_forward.1} parent=11 // pred_fallthru
        _
      // Predicated region
      $region37: #{tgcn_cell_forward.1} parent=11 // pred_check
        %p322 = pneg %p242
      $region38: #{tgcn_cell_forward.1} parent=11 // pred_check_branch
        %324 = sbr.rel (%p322) target = $region40
      $region39: #{tgcn_cell_forward.1} parent=11 // pred_region
        _
      $region40: #{tgcn_cell_forward.1} parent=11 // pred_fallthru
        _
      // Predicated region
      $region41: #{tgcn_cell_forward.1} parent=11 // pred_check
        %p325 = pneg %p263
      $region42: #{tgcn_cell_forward.1} parent=11 // pred_check_branch
        %327 = sbr.rel (%p325) target = $region44
      $region43: #{tgcn_cell_forward.1} parent=11 // pred_region
        _
      $region44: #{tgcn_cell_forward.1} parent=11 // pred_fallthru
        _
    $region12: #{tgcn_cell_forward.1} parent=5 // pred_fallthru
      _
    %p328 = scmp.lt.s32.totalorder %s17, 2
    // Predicated region
    $region45: #{tgcn_cell_forward.1} parent=5 // pred_check
      %p329 = pneg %p328
    $region46: #{tgcn_cell_forward.1} parent=5 // pred_check_branch
      %331 = sbr.rel (%p329) target = $region48
    $region47: #{tgcn_cell_forward.1} parent=5 // pred_region
      // Predicated region
      $region49: #{tgcn_cell_forward.1} parent=47 // pred_check
        %p332 = pneg %p37
      $region50: #{tgcn_cell_forward.1} parent=47 // pred_check_branch
        %334 = sbr.rel (%p332) target = $region52
      $region51: #{tgcn_cell_forward.1} parent=47 // pred_region
        %p335 = scmp.lt.s32.totalorder %s17, 1
        %s336 = scalar_select %p335, %s17, 1
        %s337 = smul.addr %s336, 2
        %s338 = smul.addr %s337, 8
        %s339 = scalar_lea.vmem %s0, %s338
      $region52: #{tgcn_cell_forward.1} parent=47 // pred_fallthru
        _
      // Predicated region
      $region53: #{tgcn_cell_forward.1} parent=47 // pred_check
        %p340 = pneg %p63
      $region54: #{tgcn_cell_forward.1} parent=47 // pred_check_branch
        %342 = sbr.rel (%p340) target = $region56
      $region55: #{tgcn_cell_forward.1} parent=47 // pred_region
        %p343 = scmp.lt.s32.totalorder %s17, 1
        %s344 = scalar_select %p343, %s17, 1
        %s345 = smul.addr %s344, 8
        %s346 = scalar_lea.vmem %s1, %s345
      $region56: #{tgcn_cell_forward.1} parent=47 // pred_fallthru
        _
      // Predicated region
      $region57: #{tgcn_cell_forward.1} parent=47 // pred_check
        %p347 = pneg %p89
      $region58: #{tgcn_cell_forward.1} parent=47 // pred_check_branch
        %349 = sbr.rel (%p347) target = $region60
      $region59: #{tgcn_cell_forward.1} parent=47 // pred_region
        %p350 = scmp.lt.s32.totalorder %s17, 1
        %s351 = scalar_select %p350, %s17, 1
        %s352 = smul.addr %s351, 8
        %s353 = scalar_lea.vmem %s2, %s352
      $region60: #{tgcn_cell_forward.1} parent=47 // pred_fallthru
        _
    $region48: #{tgcn_cell_forward.1} parent=5 // pred_fallthru
      _
    %p354 = scmp.le.s32.totalorder 1, %s17
    %p355 = scmp.lt.s32.totalorder %s17, 3
    %p356 = pnand %p354, %p355
    %p357 = pneg %p356
    // Predicated region
    $region61: #{tgcn_cell_forward.1} parent=5 // pred_check
      _
    $region62: #{tgcn_cell_forward.1} parent=5 // pred_check_branch
      %359 = sbr.rel (%p356) target = $region64
    $region63: #{tgcn_cell_forward.1} parent=5 // pred_region
      %s360 = ssub.s32 %s17, 1
      %p361 = scmp.lt.s32.totalorder %s22, 1
      %s362 = scalar_select %p361, %s22, 1
      %s363 = smul.addr %s362, 2
      %s364 = smul.addr %s363, 8
      %s365 = scalar_lea.vmem %s0, %s364
      %p366 = pneg %p43
      %p367 = pneg %p40
      %p368 = scmp.lt.s32.totalorder %s22, 1
      %s369 = scalar_select %p368, %s22, 1
      %s370 = smul.addr %s369, 8
      %s371 = scalar_lea.vmem %s1, %s370
      %p372 = pneg %p69
      %p373 = pneg %p66
      %p374 = scmp.lt.s32.totalorder %s22, 1
      %s375 = scalar_select %p374, %s22, 1
      %s376 = smul.addr %s375, 8
      %s377 = scalar_lea.vmem %s2, %s376
      %p378 = pneg %p95
      %p379 = pneg %p92
      %p380 = pneg %p116
      %p381 = pneg %p113
      %p382 = pneg %p137
      %p383 = pneg %p134
      %p384 = pneg %p158
      %p385 = pneg %p155
      %p386 = pneg %p179
      %p387 = pneg %p176
      %p388 = pneg %p200
      %p389 = pneg %p197
      %p390 = pneg %p221
      %p391 = pneg %p218
      %p392 = pneg %p242
      %p393 = pneg %p239
      %p394 = pneg %p263
      %p395 = pneg %p260
      %p396 = pneg %p289
      %p397 = pneg %p286
      %p398 = scmp.lt.s32.totalorder %s22, 1
      %s399 = scalar_select %p398, %s22, 1
      %s400 = smul.addr %s399, 8
      %s401 = scalar_lea.vmem %s11, %s400
      %p402 = scmp.lt.s32.totalorder %s22, 1
      %s403 = scalar_select %p402, %s22, 1
      %s404 = smul.addr %s403, 2
      %s405 = smul.addr %s404, 8
      %s406 = scalar_lea.vmem %s0, %s405
      %p407 = scmp.lt.s32.totalorder %s22, 1
      %s408 = scalar_select %p407, %s22, 1
      %s409 = smul.addr %s408, 8
      %s410 = scalar_lea.vmem %s1, %s409
      %p411 = scmp.lt.s32.totalorder %s22, 1
      %s412 = scalar_select %p411, %s22, 1
      %s413 = smul.addr %s412, 8
      %s414 = scalar_lea.vmem %s2, %s413
      %p415 = scmp.lt.s32.totalorder %s22, 1
      %s416 = scalar_select %p415, %s22, 1
      %s417 = smul.addr %s416, 8
      %s418 = scalar_lea.vmem %s11, %s417
      %v420 = vld [vmem:[%s414] sm:$0xff]
      %v421 = vld [vmem:[%s406] sm:$0xff]
      %v422 = vld [vmem:[%s406 + $0x8] sm:$0xff]
      %v423 = vld [vmem:[%s410] sm:$0xff]
      %v424 = vld [vmem:[%s3] sm:$0xf]
      %v425 = vld [vmem:[%s3 + $0x4] sm:$0xf]
      %v426 = vld [vmem:[%s4] sm:$0xf]
      %v427 = vld [vmem:[%s4 + $0x4] sm:$0xf]
      %v428 = vpack.c.bf16 %v420, %v420
      %v431 = vunpack.c.l.b16 %v424
      %v432 = vunpack.c.l.b16 %v425
      %v433 = vpack.c.b16 %v432, %v431
      %434 = vrot.lane.b32.xlu0 %v433, 120
      %v435 = vpop.permute.xlu0 %434
      %437 = vrot.lane.b32.xlu0 %v428, 96
      %v438 = vpop.permute.xlu0 %437
      %vm439 = vcmask 64512
      %v441 = vsel %vm439, %v435, 0
      %vm443 = vcmask 1043456
      %v445 = vsel %vm443, %v438, 0
      %447 = vmatprep.subr.bf16.mxu0 0
      %448 = vmatpush1.bf16.msra.mxu0 %v445
      %449 = vmatprep.subr.bf16.mxu0 0
      %450 = vmatpush1.bf16.msra.mxu0 0
      %451 = vmatprep.subr.bf16.mxu0 0
      %452 = vmatpush1.bf16.msra.mxu0 0
      %453 = vmatprep.subr.bf16.mxu0 0
      %454 = vmatpush1.bf16.msra.mxu0 0
      %455 = vmatprep.subr.bf16.mxu0 0
      %456 = vmatpush1.bf16.msra.mxu0 0
      %457 = vmatprep.subr.bf16.mxu0 0
      %458 = vmatpush1.bf16.msra.mxu0 0
      %459 = vmatprep.subr.bf16.mxu0 0
      %460 = vmatpush1.bf16.msra.mxu0 0
      %461 = vmatprep.subr.bf16.mxu0 0
      %462 = vmatpush1.bf16.msra.mxu0 0
      %463 = vmatprep.subr.bf16.mxu0 0
      %464 = vmatpush1.bf16.msra.mxu0 0
      %465 = vmatprep.subr.bf16.mxu0 0
      %466 = vmatpush1.bf16.msra.mxu0 0
      %467 = vmatprep.subr.bf16.mxu0 0
      %468 = vmatpush1.bf16.msra.mxu0 0
      %469 = vmatprep.subr.bf16.mxu0 0
      %470 = vmatpush1.bf16.msra.mxu0 0
      %471 = vmatprep.subr.bf16.mxu0 0
      %472 = vmatpush1.bf16.msra.mxu0 0
      %473 = vmatprep.subr.bf16.mxu0 0
      %474 = vmatpush1.bf16.msra.mxu0 0
      %475 = vmatprep.subr.bf16.mxu0 0
      %476 = vmatpush1.bf16.msra.mxu0 0
      %477 = vmatprep.subr.bf16.mxu0 0
      %478 = vmatpush1.bf16.msra.mxu0 0
      %479 = vmatprep.mubr.bf16.mxu0 0
      %480 = vmatmul.mubr.bf16.gmra.mrb[0].mxu0 %v441
      %v481 = vpop.f32.mrb[0].mxu0
      %v482 = vadd.f32 0.0, %v481
      %v483 = vpop.f32.mrb[0].mxu0
      %v484 = vpop.f32.mrb[0].mxu0
      %v485 = vadd.f32 0.0, %v484
      %v486 = vpop.f32.mrb[0].mxu0
      %487 = vdwg.mxu0
      %v489 = vsel %vm439, %v433, 0
      %v492 = vsel %vm443, %v428, 0
      %494 = vmatprep.subr.bf16.mxu0 0
      %495 = vmatpush1.bf16.msra.mxu0 %v492
      %496 = vmatprep.subr.bf16.mxu0 0
      %497 = vmatpush1.bf16.msra.mxu0 0
      %498 = vmatprep.subr.bf16.mxu0 0
      %499 = vmatpush1.bf16.msra.mxu0 0
      %500 = vmatprep.subr.bf16.mxu0 0
      %501 = vmatpush1.bf16.msra.mxu0 0
      %502 = vmatprep.subr.bf16.mxu0 0
      %503 = vmatpush1.bf16.msra.mxu0 0
      %504 = vmatprep.subr.bf16.mxu0 0
      %505 = vmatpush1.bf16.msra.mxu0 0
      %506 = vmatprep.subr.bf16.mxu0 0
      %507 = vmatpush1.bf16.msra.mxu0 0
      %508 = vmatprep.subr.bf16.mxu0 0
      %509 = vmatpush1.bf16.msra.mxu0 0
      %510 = vmatprep.subr.bf16.mxu0 0
      %511 = vmatpush1.bf16.msra.mxu0 0
      %512 = vmatprep.subr.bf16.mxu0 0
      %513 = vmatpush1.bf16.msra.mxu0 0
      %514 = vmatprep.subr.bf16.mxu0 0
      %515 = vmatpush1.bf16.msra.mxu0 0
      %516 = vmatprep.subr.bf16.mxu0 0
      %517 = vmatpush1.bf16.msra.mxu0 0
      %518 = vmatprep.subr.bf16.mxu0 0
      %519 = vmatpush1.bf16.msra.mxu0 0
      %520 = vmatprep.subr.bf16.mxu0 0
      %521 = vmatpush1.bf16.msra.mxu0 0
      %522 = vmatprep.subr.bf16.mxu0 0
      %523 = vmatpush1.bf16.msra.mxu0 0
      %524 = vmatprep.subr.bf16.mxu0 0
      %525 = vmatpush1.bf16.msra.mxu0 0
      %526 = vmatprep.mubr.bf16.mxu0 0
      %527 = vmatmul.mubr.bf16.gmra.mrb[0].mxu0 %v489
      %v528 = vpop.f32.mrb[0].mxu0
      %v529 = vadd.f32 %v482, %v528
      %v530 = vpop.f32.mrb[0].mxu0
      %v531 = vpop.f32.mrb[0].mxu0
      %v532 = vadd.f32 %v485, %v531
      %v533 = vpop.f32.mrb[0].mxu0
      %534 = vdwg.mxu0
      %v535 = vld [vmem:[%s5] sm:$0x1]
      %537 = vset.pattern.permute.xlu0 0
      %538 = vperm.xlu0 %537, %v421
      %v539 = vpop.permute.xlu0 %538
      %542 = vset.pattern.permute.xlu0 0
      %543 = vperm.xlu0 %542, %v422
      %v544 = vpop.permute.xlu0 %543
      %v547 = vlaneseq
      %v548 = vshrl.u32 %v547, 7
      %v549 = vsub.s32 0, %v548
      %v550 = vrot.slane %v535, %v549
      %v552 = vmul.f32 %v539, %v550
      %v553 = vmul.f32 %v544, %v550
      %v554 = vpack.c.bf16 %v532, %v529
      %v555 = vld [vmem:[%s6] sm:$0xf]
      %v556 = vld [vmem:[%s6 + $0x4] sm:$0xf]
      %v557 = vld [vmem:[%s6 + $0x8] sm:$0xf]
      %v558 = vld [vmem:[%s6 + $0xc] sm:$0xf]
      %v563 = vunpack.c.l.b16 %v555
      %v564 = vunpack.c.l.b16 %v556
      %v565 = vunpack.c.l.b16 %v557
      %v566 = vunpack.c.l.b16 %v558
      %v567 = vpack.c.b16 %v564, %v563
      %v568 = vpack.c.b16 %v566, %v565
      %vm571 = vcmask 261120
      %v573 = vsel %vm571, %v554, 0
      %575 = vmatprep.subr.bf16.mxu0 0
      %576 = vmatpush1.bf16.msra.mxu0 %v567
      %577 = vmatprep.subr.bf16.mxu0 0
      %578 = vmatpush1.bf16.msra.mxu0 %v568
      %579 = vmatprep.subr.bf16.mxu0 0
      %580 = vmatpush1.bf16.msra.mxu0 0
      %581 = vmatprep.subr.bf16.mxu0 0
      %582 = vmatpush1.bf16.msra.mxu0 0
      %583 = vmatprep.subr.bf16.mxu0 0
      %584 = vmatpush1.bf16.msra.mxu0 0
      %585 = vmatprep.subr.bf16.mxu0 0
      %586 = vmatpush1.bf16.msra.mxu0 0
      %587 = vmatprep.subr.bf16.mxu0 0
      %588 = vmatpush1.bf16.msra.mxu0 0
      %589 = vmatprep.subr.bf16.mxu0 0
      %590 = vmatpush1.bf16.msra.mxu0 0
      %591 = vmatprep.subr.bf16.mxu0 0
      %592 = vmatpush1.bf16.msra.mxu0 0
      %593 = vmatprep.subr.bf16.mxu0 0
      %594 = vmatpush1.bf16.msra.mxu0 0
      %595 = vmatprep.subr.bf16.mxu0 0
      %596 = vmatpush1.bf16.msra.mxu0 0
      %597 = vmatprep.subr.bf16.mxu0 0
      %598 = vmatpush1.bf16.msra.mxu0 0
      %599 = vmatprep.subr.bf16.mxu0 0
      %600 = vmatpush1.bf16.msra.mxu0 0
      %601 = vmatprep.subr.bf16.mxu0 0
      %602 = vmatpush1.bf16.msra.mxu0 0
      %603 = vmatprep.subr.bf16.mxu0 0
      %604 = vmatpush1.bf16.msra.mxu0 0
      %605 = vmatprep.subr.bf16.mxu0 0
      %606 = vmatpush1.bf16.msra.mxu0 0
      %607 = vmatprep.mubr.bf16.mxu0 0
      %608 = vmatmul.mubr.bf16.gmra.mrb[0].mxu0 %v573
      %v609 = vpop.f32.mrb[0].mxu0
      %v610 = vadd.f32 0.0, %v609
      %v611 = vpop.f32.mrb[0].mxu0
      %v612 = vpop.f32.mrb[0].mxu0
      %v613 = vadd.f32 0.0, %v612
      %v614 = vpop.f32.mrb[0].mxu0
      %615 = vdwg.mxu0
      %v616 = vadd.f32 %v552, %v610
      %v617 = vadd.f32 %v553, %v613
      %v618 = vld [vmem:[%s7] sm:$0x1]
      %v620 = vlaneseq
      %v621 = vshrl.u32 %v620, 7
      %v622 = vsub.s32 0, %v621
      %v623 = vrot.slane %v618, %v622
      %v625 = vadd.f32 %v616, %v623
      %v626 = vadd.f32 %v617, %v623
      %v627 = vxor.u32 %v625, 2147483648
      %v628 = vxor.u32 %v626, 2147483648
      %v629 = vmul.f32 %v627, 1.442695
      %v630 = vpow.pop %v629
      %v631 = vmul.f32 %v628, 1.442695
      %v632 = vpow.pop %v631
      %v633 = vadd.f32 %v630, 1.0
      %v634 = vadd.f32 %v632, 1.0
      %v635 = vrcp.pop %v633
      %v636 = vmul.f32 1.0, %v635
      %v637 = vrcp.pop %v634
      %v638 = vmul.f32 1.0, %v637
      %v639 = vmul.f32 %v636, %v420
      %v640 = vpack.c.bf16 %v639, %v639
      %v642 = vunpack.c.l.b16 %v426
      %v643 = vpack.c.b16 %v642, %v642
      %644 = vrot.lane.b32.xlu0 %v643, 120
      %v645 = vpop.permute.xlu0 %644
      %647 = vrot.lane.b32.xlu0 %v640, 96
      %v648 = vpop.permute.xlu0 %647
      %v650 = vsel %vm439, %v645, 0
      %v653 = vsel %vm443, %v648, 0
      %655 = vmatprep.subr.bf16.mxu0 0
      %656 = vmatpush1.bf16.msra.mxu0 %v653
      %657 = vmatprep.subr.bf16.mxu0 0
      %658 = vmatpush1.bf16.msra.mxu0 0
      %659 = vmatprep.subr.bf16.mxu0 0
      %660 = vmatpush1.bf16.msra.mxu0 0
      %661 = vmatprep.subr.bf16.mxu0 0
      %662 = vmatpush1.bf16.msra.mxu0 0
      %663 = vmatprep.subr.bf16.mxu0 0
      %664 = vmatpush1.bf16.msra.mxu0 0
      %665 = vmatprep.subr.bf16.mxu0 0
      %666 = vmatpush1.bf16.msra.mxu0 0
      %667 = vmatprep.subr.bf16.mxu0 0
      %668 = vmatpush1.bf16.msra.mxu0 0
      %669 = vmatprep.subr.bf16.mxu0 0
      %670 = vmatpush1.bf16.msra.mxu0 0
      %671 = vmatprep.subr.bf16.mxu0 0
      %672 = vmatpush1.bf16.msra.mxu0 0
      %673 = vmatprep.subr.bf16.mxu0 0
      %674 = vmatpush1.bf16.msra.mxu0 0
      %675 = vmatprep.subr.bf16.mxu0 0
      %676 = vmatpush1.bf16.msra.mxu0 0
      %677 = vmatprep.subr.bf16.mxu0 0
      %678 = vmatpush1.bf16.msra.mxu0 0
      %679 = vmatprep.subr.bf16.mxu0 0
      %680 = vmatpush1.bf16.msra.mxu0 0
      %681 = vmatprep.subr.bf16.mxu0 0
      %682 = vmatpush1.bf16.msra.mxu0 0
      %683 = vmatprep.subr.bf16.mxu0 0
      %684 = vmatpush1.bf16.msra.mxu0 0
      %685 = vmatprep.subr.bf16.mxu0 0
      %686 = vmatpush1.bf16.msra.mxu0 0
      %687 = vmatprep.mubr.bf16.mxu0 0
      %688 = vmatmul.mubr.bf16.gmra.mrb[0].mxu0 %v650
      %v689 = vpop.f32.mrb[0].mxu0
      %v690 = vadd.f32 0.0, %v689
      %v691 = vpop.f32.mrb[0].mxu0
      %v692 = vpop.f32.mrb[0].mxu0
      %v693 = vpop.f32.mrb[0].mxu0
      %694 = vdwg.mxu0
      %v696 = vsel %vm439, %v426, 0
      %v699 = vsel %vm443, %v640, 0
      %701 = vmatprep.subr.bf16.mxu0 0
      %702 = vmatpush1.bf16.msra.mxu0 %v699
      %703 = vmatprep.subr.bf16.mxu0 0
      %704 = vmatpush1.bf16.msra.mxu0 0
      %705 = vmatprep.subr.bf16.mxu0 0
      %706 = vmatpush1.bf16.msra.mxu0 0
      %707 = vmatprep.subr.bf16.mxu0 0
      %708 = vmatpush1.bf16.msra.mxu0 0
      %709 = vmatprep.subr.bf16.mxu0 0
      %710 = vmatpush1.bf16.msra.mxu0 0
      %711 = vmatprep.subr.bf16.mxu0 0
      %712 = vmatpush1.bf16.msra.mxu0 0
      %713 = vmatprep.subr.bf16.mxu0 0
      %714 = vmatpush1.bf16.msra.mxu0 0
      %715 = vmatprep.subr.bf16.mxu0 0
      %716 = vmatpush1.bf16.msra.mxu0 0
      %717 = vmatprep.subr.bf16.mxu0 0
      %718 = vmatpush1.bf16.msra.mxu0 0
      %719 = vmatprep.subr.bf16.mxu0 0
      %720 = vmatpush1.bf16.msra.mxu0 0
      %721 = vmatprep.subr.bf16.mxu0 0
      %722 = vmatpush1.bf16.msra.mxu0 0
      %723 = vmatprep.subr.bf16.mxu0 0
      %724 = vmatpush1.bf16.msra.mxu0 0
      %725 = vmatprep.subr.bf16.mxu0 0
      %726 = vmatpush1.bf16.msra.mxu0 0
      %727 = vmatprep.subr.bf16.mxu0 0
      %728 = vmatpush1.bf16.msra.mxu0 0
      %729 = vmatprep.subr.bf16.mxu0 0
      %730 = vmatpush1.bf16.msra.mxu0 0
      %731 = vmatprep.subr.bf16.mxu0 0
      %732 = vmatpush1.bf16.msra.mxu0 0
      %733 = vmatprep.mubr.bf16.mxu0 0
      %734 = vmatmul.mubr.bf16.gmra.mrb[0].mxu0 %v696
      %v735 = vpop.f32.mrb[0].mxu0
      %v736 = vadd.f32 %v690, %v735
      %v737 = vpop.f32.mrb[0].mxu0
      %v738 = vpop.f32.mrb[0].mxu0
      %v739 = vpop.f32.mrb[0].mxu0
      %740 = vdwg.mxu0
      %v742 = vunpack.c.l.b16 %v427
      %v743 = vpack.c.b16 %v742, %v742
      %744 = vrot.lane.b32.xlu0 %v743, 120
      %v745 = vpop.permute.xlu0 %744
      %v747 = vsel %vm439, %v745, 0
      %749 = vmatprep.subr.bf16.mxu0 0
      %750 = vmatpush1.bf16.msra.mxu0 %v653
      %751 = vmatprep.subr.bf16.mxu0 0
      %752 = vmatpush1.bf16.msra.mxu0 0
      %753 = vmatprep.subr.bf16.mxu0 0
      %754 = vmatpush1.bf16.msra.mxu0 0
      %755 = vmatprep.subr.bf16.mxu0 0
      %756 = vmatpush1.bf16.msra.mxu0 0
      %757 = vmatprep.subr.bf16.mxu0 0
      %758 = vmatpush1.bf16.msra.mxu0 0
      %759 = vmatprep.subr.bf16.mxu0 0
      %760 = vmatpush1.bf16.msra.mxu0 0
      %761 = vmatprep.subr.bf16.mxu0 0
      %762 = vmatpush1.bf16.msra.mxu0 0
      %763 = vmatprep.subr.bf16.mxu0 0
      %764 = vmatpush1.bf16.msra.mxu0 0
      %765 = vmatprep.subr.bf16.mxu0 0
      %766 = vmatpush1.bf16.msra.mxu0 0
      %767 = vmatprep.subr.bf16.mxu0 0
      %768 = vmatpush1.bf16.msra.mxu0 0
      %769 = vmatprep.subr.bf16.mxu0 0
      %770 = vmatpush1.bf16.msra.mxu0 0
      %771 = vmatprep.subr.bf16.mxu0 0
      %772 = vmatpush1.bf16.msra.mxu0 0
      %773 = vmatprep.subr.bf16.mxu0 0
      %774 = vmatpush1.bf16.msra.mxu0 0
      %775 = vmatprep.subr.bf16.mxu0 0
      %776 = vmatpush1.bf16.msra.mxu0 0
      %777 = vmatprep.subr.bf16.mxu0 0
      %778 = vmatpush1.bf16.msra.mxu0 0
      %779 = vmatprep.subr.bf16.mxu0 0
      %780 = vmatpush1.bf16.msra.mxu0 0
      %781 = vmatprep.mubr.bf16.mxu0 0
      %782 = vmatmul.mubr.bf16.gmra.mrb[0].mxu0 %v747
      %v783 = vpop.f32.mrb[0].mxu0
      %v784 = vadd.f32 0.0, %v783
      %v785 = vpop.f32.mrb[0].mxu0
      %v786 = vpop.f32.mrb[0].mxu0
      %v787 = vpop.f32.mrb[0].mxu0
      %788 = vdwg.mxu0
      %v790 = vsel %vm439, %v427, 0
      %792 = vmatprep.subr.bf16.mxu0 0
      %793 = vmatpush1.bf16.msra.mxu0 %v699
      %794 = vmatprep.subr.bf16.mxu0 0
      %795 = vmatpush1.bf16.msra.mxu0 0
      %796 = vmatprep.subr.bf16.mxu0 0
      %797 = vmatpush1.bf16.msra.mxu0 0
      %798 = vmatprep.subr.bf16.mxu0 0
      %799 = vmatpush1.bf16.msra.mxu0 0
      %800 = vmatprep.subr.bf16.mxu0 0
      %801 = vmatpush1.bf16.msra.mxu0 0
      %802 = vmatprep.subr.bf16.mxu0 0
      %803 = vmatpush1.bf16.msra.mxu0 0
      %804 = vmatprep.subr.bf16.mxu0 0
      %805 = vmatpush1.bf16.msra.mxu0 0
      %806 = vmatprep.subr.bf16.mxu0 0
      %807 = vmatpush1.bf16.msra.mxu0 0
      %808 = vmatprep.subr.bf16.mxu0 0
      %809 = vmatpush1.bf16.msra.mxu0 0
      %810 = vmatprep.subr.bf16.mxu0 0
      %811 = vmatpush1.bf16.msra.mxu0 0
      %812 = vmatprep.subr.bf16.mxu0 0
      %813 = vmatpush1.bf16.msra.mxu0 0
      %814 = vmatprep.subr.bf16.mxu0 0
      %815 = vmatpush1.bf16.msra.mxu0 0
      %816 = vmatprep.subr.bf16.mxu0 0
      %817 = vmatpush1.bf16.msra.mxu0 0
      %818 = vmatprep.subr.bf16.mxu0 0
      %819 = vmatpush1.bf16.msra.mxu0 0
      %820 = vmatprep.subr.bf16.mxu0 0
      %821 = vmatpush1.bf16.msra.mxu0 0
      %822 = vmatprep.subr.bf16.mxu0 0
      %823 = vmatpush1.bf16.msra.mxu0 0
      %824 = vmatprep.mubr.bf16.mxu0 0
      %825 = vmatmul.mubr.bf16.gmra.mrb[0].mxu0 %v790
      %v826 = vpop.f32.mrb[0].mxu0
      %v827 = vadd.f32 %v784, %v826
      %v828 = vpop.f32.mrb[0].mxu0
      %v829 = vpop.f32.mrb[0].mxu0
      %v830 = vpop.f32.mrb[0].mxu0
      %831 = vdwg.mxu0
      %v832 = vld [vmem:[%s8] sm:$0x1]
      %v833 = vld [vmem:[%s10] sm:$0x1]
      %835 = vset.pattern.permute.xlu0 0
      %836 = vperm.xlu0 %835, %v423
      %v837 = vpop.permute.xlu0 %836
      %v840 = vlaneseq
      %v841 = vshrl.u32 %v840, 7
      %v842 = vsub.s32 0, %v841
      %v843 = vrot.slane %v832, %v842
      %v845 = vmul.f32 %v837, %v843
      %v846 = vpack.c.bf16 %v736, %v736
      %v847 = vld [vmem:[%s9] sm:$0xf]
      %v848 = vld [vmem:[%s9 + $0x4] sm:$0xf]
      %v849 = vld [vmem:[%s9 + $0x8] sm:$0xf]
      %v850 = vld [vmem:[%s9 + $0xc] sm:$0xf]
      %v855 = vunpack.c.l.b16 %v847
      %v856 = vunpack.c.l.b16 %v848
      %v857 = vunpack.c.l.b16 %v849
      %v858 = vunpack.c.l.b16 %v850
      %v859 = vpack.c.b16 %v856, %v855
      %v860 = vpack.c.b16 %v858, %v857
      %v864 = vsel %vm571, %v846, 0
      %866 = vmatprep.subr.bf16.mxu0 0
      %867 = vmatpush1.bf16.msra.mxu0 %v859
      %868 = vmatprep.subr.bf16.mxu0 0
      %869 = vmatpush1.bf16.msra.mxu0 %v860
      %870 = vmatprep.subr.bf16.mxu0 0
      %871 = vmatpush1.bf16.msra.mxu0 0
      %872 = vmatprep.subr.bf16.mxu0 0
      %873 = vmatpush1.bf16.msra.mxu0 0
      %874 = vmatprep.subr.bf16.mxu0 0
      %875 = vmatpush1.bf16.msra.mxu0 0
      %876 = vmatprep.subr.bf16.mxu0 0
      %877 = vmatpush1.bf16.msra.mxu0 0
      %878 = vmatprep.subr.bf16.mxu0 0
      %879 = vmatpush1.bf16.msra.mxu0 0
      %880 = vmatprep.subr.bf16.mxu0 0
      %881 = vmatpush1.bf16.msra.mxu0 0
      %882 = vmatprep.subr.bf16.mxu0 0
      %883 = vmatpush1.bf16.msra.mxu0 0
      %884 = vmatprep.subr.bf16.mxu0 0
      %885 = vmatpush1.bf16.msra.mxu0 0
      %886 = vmatprep.subr.bf16.mxu0 0
      %887 = vmatpush1.bf16.msra.mxu0 0
      %888 = vmatprep.subr.bf16.mxu0 0
      %889 = vmatpush1.bf16.msra.mxu0 0
      %890 = vmatprep.subr.bf16.mxu0 0
      %891 = vmatpush1.bf16.msra.mxu0 0
      %892 = vmatprep.subr.bf16.mxu0 0
      %893 = vmatpush1.bf16.msra.mxu0 0
      %894 = vmatprep.subr.bf16.mxu0 0
      %895 = vmatpush1.bf16.msra.mxu0 0
      %896 = vmatprep.subr.bf16.mxu0 0
      %897 = vmatpush1.bf16.msra.mxu0 0
      %898 = vmatprep.mubr.bf16.mxu0 0
      %899 = vmatmul.mubr.bf16.gmra.mrb[0].mxu0 %v864
      %v900 = vpop.f32.mrb[0].mxu0
      %v901 = vadd.f32 0.0, %v900
      %v902 = vpop.f32.mrb[0].mxu0
      %v903 = vpop.f32.mrb[0].mxu0
      %v904 = vpop.f32.mrb[0].mxu0
      %905 = vdwg.mxu0
      %v906 = vadd.f32 %v845, %v901
      %v908 = vlaneseq
      %v909 = vshrl.u32 %v908, 7
      %v910 = vsub.s32 0, %v909
      %v911 = vrot.slane %v833, %v910
      %v913 = vadd.f32 %v906, %v911
      %v914 = vtanh.pop %v913
      %915 = vset.pattern.permute.xlu0 1
      %916 = vperm.xlu0 %915, %v423
      %v917 = vpop.permute.xlu0 %916
      %v919 = vmul.f32 %v917, %v843
      %v920 = vpack.c.bf16 %v827, %v827
      %v922 = vsel %vm571, %v920, 0
      %924 = vmatprep.subr.bf16.mxu0 0
      %925 = vmatpush1.bf16.msra.mxu0 %v859
      %926 = vmatprep.subr.bf16.mxu0 0
      %927 = vmatpush1.bf16.msra.mxu0 %v860
      %928 = vmatprep.subr.bf16.mxu0 0
      %929 = vmatpush1.bf16.msra.mxu0 0
      %930 = vmatprep.subr.bf16.mxu0 0
      %931 = vmatpush1.bf16.msra.mxu0 0
      %932 = vmatprep.subr.bf16.mxu0 0
      %933 = vmatpush1.bf16.msra.mxu0 0
      %934 = vmatprep.subr.bf16.mxu0 0
      %935 = vmatpush1.bf16.msra.mxu0 0
      %936 = vmatprep.subr.bf16.mxu0 0
      %937 = vmatpush1.bf16.msra.mxu0 0
      %938 = vmatprep.subr.bf16.mxu0 0
      %939 = vmatpush1.bf16.msra.mxu0 0
      %940 = vmatprep.subr.bf16.mxu0 0
      %941 = vmatpush1.bf16.msra.mxu0 0
      %942 = vmatprep.subr.bf16.mxu0 0
      %943 = vmatpush1.bf16.msra.mxu0 0
      %944 = vmatprep.subr.bf16.mxu0 0
      %945 = vmatpush1.bf16.msra.mxu0 0
      %946 = vmatprep.subr.bf16.mxu0 0
      %947 = vmatpush1.bf16.msra.mxu0 0
      %948 = vmatprep.subr.bf16.mxu0 0
      %949 = vmatpush1.bf16.msra.mxu0 0
      %950 = vmatprep.subr.bf16.mxu0 0
      %951 = vmatpush1.bf16.msra.mxu0 0
      %952 = vmatprep.subr.bf16.mxu0 0
      %953 = vmatpush1.bf16.msra.mxu0 0
      %954 = vmatprep.subr.bf16.mxu0 0
      %955 = vmatpush1.bf16.msra.mxu0 0
      %956 = vmatprep.mubr.bf16.mxu0 0
      %957 = vmatmul.mubr.bf16.gmra.mrb[0].mxu0 %v922
      %v958 = vpop.f32.mrb[0].mxu0
      %v959 = vadd.f32 0.0, %v958
      %v960 = vpop.f32.mrb[0].mxu0
      %v961 = vpop.f32.mrb[0].mxu0
      %v962 = vpop.f32.mrb[0].mxu0
      %963 = vdwg.mxu0
      %v964 = vadd.f32 %v919, %v959
      %v965 = vadd.f32 %v964, %v911
      %v966 = vtanh.pop %v965
      %v967 = vmul.f32 %v638, %v420
      %v968 = vsub.f32 1.0, %v638
      %v969 = vmul.f32 %v968, %v914
      %v970 = vadd.f32 %v967, %v969
      %971 = vst.msk [vmem:[%s418] sm:$0xff] %vm571, %v970
      %973 = vrot.lane.b32.xlu0 %v966, 32
      %v974 = vpop.permute.xlu0 %973
      %v976 = vmul.f32 %v968, %v974
      %v977 = vadd.f32 %v967, %v976
      %vm978 = vcmask 523520
      %979 = vst.msk [vmem:[%s418] sm:$0xff] %vm978, %v977
      %p980 = scmp.lt.s32.totalorder %s22, 1
      %s981 = scalar_select %p980, %s22, 1
      %s982 = smul.addr %s981, 8
      %s983 = scalar_lea.vmem %s11, %s982
      // Predicated region
      $region65: #{tgcn_cell_forward.1} parent=63 // pred_check
        %p984 = pneg %p286
      $region66: #{tgcn_cell_forward.1} parent=63 // pred_check_branch
        %986 = sbr.rel (%p984) target = $region68
      $region67: #{tgcn_cell_forward.1} parent=63 // pred_region
        _
      $region68: #{tgcn_cell_forward.1} parent=63 // pred_fallthru
        _
    $region64: #{tgcn_cell_forward.1} parent=5 // pred_fallthru
      _
    %p987 = scmp.le.s32.totalorder 2, %s17
    // Predicated region
    $region69: #{tgcn_cell_forward.1} parent=5 // pred_check
      %p988 = pneg %p987
    $region70: #{tgcn_cell_forward.1} parent=5 // pred_check_branch
      %990 = sbr.rel (%p988) target = $region72
    $region71: #{tgcn_cell_forward.1} parent=5 // pred_region
      %s991 = ssub.s32 %s17, 2
      // Predicated region
      $region73: #{tgcn_cell_forward.1} parent=71 // pred_check
        %p992 = pneg %p292
      $region74: #{tgcn_cell_forward.1} parent=71 // pred_check_branch
        %994 = sbr.rel (%p992) target = $region76
      $region75: #{tgcn_cell_forward.1} parent=71 // pred_region
        %p995 = scmp.lt.s32.totalorder %s23, 1
        %s996 = scalar_select %p995, %s23, 1
        %s997 = smul.addr %s996, 8
        %s998 = scalar_lea.vmem %s11, %s997
      $region76: #{tgcn_cell_forward.1} parent=71 // pred_fallthru
        _
    $region72: #{tgcn_cell_forward.1} parent=5 // pred_fallthru
      _
  $region6: #{tgcn_cell_forward.1} parent=0 // loop_footer
    %s21 = sadd.s32 1, %s17
  $region7: #{tgcn_cell_forward.1} parent=0 // loop_footer_branch
    %16 = sbr.rel target = $region3
  $region8: #{tgcn_cell_forward.1} parent=0 // loop_exit
    _

</llo_original>
